<compile_context>
chip_gen: v7x
topology: tpu7x:2x2x1
jax: 0.10.0
libtpu: 0.0.40
codegen_flags: <defaults>
</compile_context>

<pallas_src>
import jax
import jax.numpy as jnp
from jax.experimental import pallas as pl
from jax.experimental.pallas import tpu as pltpu


# ----------------------------------------------------------------------------
# Generation-aware budgets / tiling policy
# ----------------------------------------------------------------------------
_TPU_CFG = None


def _tpu_config():
    """Query the chip once and derive the VMEM / parallelism policy."""
    global _TPU_CFG
    if _TPU_CFG is None:
        vmem = None
        try:
            vmem = int(pltpu.get_tpu_info().vmem_capacity_bytes)
        except Exception:           # unknown backend / interpret mode
            vmem = None
        if vmem is not None and vmem >= 96 * 1024 * 1024:
            # v5e / v6e: 128 MiB VMEM, single TensorCore -> big tiles.
            _TPU_CFG = dict(vmem_limit=64 * 1024 * 1024,
                            tile_budget=12 * 1024 * 1024,
                            w_resident_bytes=48 * 1024 * 1024,
                            min_parallel=1)
        else:
            # v7x-like (64 MiB VMEM, 2 TensorCores) or unknown: conservative
            # tiles, keep >= 2 blocks on the "parallel" axis for both cores.
            _TPU_CFG = dict(vmem_limit=40 * 1024 * 1024,
                            tile_budget=5 * 1024 * 1024,
                            w_resident_bytes=8 * 1024 * 1024,
                            min_parallel=2)
    return _TPU_CFG


def _compiler_params(dimension_semantics, cfg):
    return pltpu.CompilerParams(dimension_semantics=dimension_semantics,
                                vmem_limit_bytes=cfg["vmem_limit"])


def _pick_tile(n, item_bytes, cfg, *, tokens_per_item=1, pack=1,
               sublane_align=True):
    """Items per tile along the blocked ("parallel") grid axis.

    Largest divisor of `n` whose working set fits the per-tile VMEM budget,
    subject to (a) the derived second-to-last output block dim being a
    multiple of 8 (or the full extent) and (b) leaving >= cfg["min_parallel"]
    tiles when the chip has more than one TensorCore.  Never returns an
    illegal block size and never silently exceeds the (8,128) rule.
    """
    def legal(d):
        tok = d * tokens_per_item
        if tok % pack:
            return False
        if not sublane_align:
            return True
        return (tok // pack) % 8 == 0 or d == n

    divs = [d for d in range(1, n + 1) if n % d == 0 and legal(d)]
    if not divs:
        return n                                    # full block (always legal)
    budget_cap = max(1, cfg["tile_budget"] // max(1, item_bytes))
    fit = [d for d in divs if d <= budget_cap] or [min(divs)]
    if cfg["min_parallel"] > 1:
        split = [d for d in fit if d <= n // cfg["min_parallel"]]
        if split:
            fit = split
    return max(fit)


# ----------------------------------------------------------------------------
# In-kernel helpers (traced inside the Pallas bodies; all math in f32)
# ----------------------------------------------------------------------------
def _ln(v, g, b, eps=1e-5):
    """PyTorch-style LayerNorm over the last dim (biased variance, eps=1e-5)."""
    mu = jnp.mean(v, axis=-1, keepdims=True)
    var = jnp.mean(jnp.square(v - mu), axis=-1, keepdims=True)
    return (v - mu) * jax.lax.rsqrt(var + eps) * g + b


def _ln_seg(v, g, b, mseg, eps=1e-5):
    """LayerNorm over equal-width lane *segments* of v's last dim.

    `mseg` is the (L, L) block matrix holding 1/seg_width inside each diagonal
    segment block, so the segment mean / variance come out of two MXU matmuls
    already broadcast across their segment (keeps the XLU idle and every vreg
    lane-dense).  `g`, `b` are the per-segment-tiled affine params.
    """
    mu = jnp.dot(v, mseg, preferred_element_type=jnp.float32)
    var = jnp.dot(jnp.square(v - mu), mseg, preferred_element_type=jnp.float32)
    return (v - mu) * jax.lax.rsqrt(var + eps) * g + b


def _gelu_tanh(x):
    """nn.GELU(approximate='tanh')."""
    c = 0.7978845608028654  # sqrt(2/pi)
    return 0.5 * x * (1.0 + jnp.tanh(c * (x + 0.044715 * x * x * x)))


# ----------------------------------------------------------------------------
# Fused [PatchMerging] + Swin block stack kernel.
# grid = (row_tiles, max(depth, 1)); activation resident (revisited output).
# ----------------------------------------------------------------------------
def _make_stack_kernel(*, fuse_merge, depth, use_seg, slice_w):
    def kernel(*refs):
        k = 0
        x_ref = refs[k]; k += 1
        if fuse_merge:
            gm0, gm1, bl0, bl1, wm0, wm1, bml = refs[k:k + 7]; k += 7
        if depth > 0:
            if use_seg:
                mseg_ref = refs[k]; k += 1
            g1_ref, b1_ref, g2_ref, b2_ref = refs[k:k + 4]; k += 4
            w1_ref, bb1_ref, w2_ref, bb2_ref = refs[k:k + 4]; k += 4
        o_ref = refs[k]

        d = pl.program_id(1)

        # -- stage 0: bring the activation tile into VMEM (optionally fused
        #    with PatchMerging), already in the lane-dense packed layout ------
        @pl.when(d == 0)
        def _():
            if fuse_merge:
                xb = x_ref[...]                               # (tb, 2, Wo, Cb)
                tb, _, wo, cb = xb.shape
                r = tb * wo
                x0 = xb[:, 0].reshape(r, cb)                  # cat groups (0,0),(0,1)
                x1 = xb[:, 1].reshape(r, cb)                  # cat groups (1,0),(1,1)
                inv_n = 1.0 / (2.0 * cb)                      # joint LN over 4C
                mu = (jnp.sum(x0, axis=-1, keepdims=True)
                      + jnp.sum(x1, axis=-1, keepdims=True)) * inv_n
                var = (jnp.sum(jnp.square(x0 - mu), axis=-1, keepdims=True)
                       + jnp.sum(jnp.square(x1 - mu), axis=-1,
                                 keepdims=True)) * inv_n
                inv = jax.lax.rsqrt(var + 1e-5)
                xn0 = (x0 - mu) * inv * gm0[...] + bl0[...]
                xn1 = (x1 - mu) * inv * gm1[...] + bl1[...]
                # Linear(4C->2C) split into its two 2C-row halves (concat-free)
                h = (jnp.dot(xn0.astype(jnp.bfloat16), wm0[...],
                             preferred_element_type=jnp.float32)
                     + jnp.dot(xn1.astype(jnp.bfloat16), wm1[...],
                               preferred_element_type=jnp.float32)
                     + bml[...])                               # (r, 2C)
                # repack P consecutive tokens into each 128-lane output row
                cout = h.shape[-1]
                p = o_ref.shape[1] // cout
                hr = h.reshape(o_ref.shape[0], p, cout)
                o_ref[...] = jnp.concatenate(
                    [hr[:, j, :] for j in range(p)], axis=-1)
            else:
                o_ref[...] = x_ref[...].astype(jnp.float32)

        # -- Swin block d:  y = x + LN1(x);  out = y + MLP(LN2(y)) ------------
        if depth > 0:
            if use_seg:
                mseg = mseg_ref[...]
                ln = lambda v, g, b: _ln_seg(v, g, b, mseg)
            else:
                ln = _ln
            dw = 0 if slice_w else d
            y = o_ref[...]
            y = y + ln(y, g1_ref[d], b1_ref[d])
            h = jnp.dot(ln(y, g2_ref[d], b2_ref[d]).astype(jnp.bfloat16),
                        w1_ref[dw],
                        preferred_element_type=jnp.float32) + bb1_ref[d]
            h = _gelu_tanh(h)
            o_ref[...] = y + jnp.dot(h.astype(jnp.bfloat16), w2_ref[dw],
                                     preferred_element_type=jnp.float32
                                     ) + bb2_ref[d]

    return kernel


def _swin_stack(x, merge, blk):
    """[optional fused PatchMerging] + `depth` Swin blocks in ONE pallas_call."""
    cfg = _tpu_config()
    B, H, W, C = x.shape
    fuse_merge = merge is not None
    Ho, Wo, Cb = (H // 2, W // 2, 2 * C) if fuse_merge else (H, W, C)
    depth = int(blk["g1"].shape[0]) if blk is not None else 0
    hid = int(blk["w1"].shape[2]) if depth else 0
    ntok = B * Ho * Wo

    # lane-dense packing factor for the working channel width Cb
    p = 128 // Cb if (Cb < 128 and 128 % Cb == 0
                      and ntok % (128 // Cb) == 0) else 1
    use_seg = depth > 0 and p > 1

    operands, in_specs = [], []

    def add_const(a):
        operands.append(a)
        zeros = (0,) * a.ndim
        in_specs.append(pl.BlockSpec(a.shape, lambda i, d, _z=zeros: _z))

    # ---- activation input & tile choice along the 'parallel' axis ----------
    if fuse_merge:
        xr = x.reshape(B * Ho, 2, Wo, Cb)        # free reshape: row-pair bands
        n_items, tok_per_item = B * Ho, Wo
        item_bytes = 4 * Wo * (12 * Cb + 2 * hid)
        tile = _pick_tile(n_items, item_bytes, cfg,
                          tokens_per_item=tok_per_item, pack=p)
        operands.append(xr)
        in_specs.append(pl.BlockSpec((tile, 2, Wo, Cb),
                                     lambda i, d: (i, 0, 0, 0)))
    else:
        xp = x.reshape(ntok // p, p * Cb)        # free reshape: packed rows
        n_items, tok_per_item = ntok // p, p
        item_bytes = 4 * p * (8 * Cb + 2 * hid)
        tile = _pick_tile(n_items, item_bytes, cfg)
        operands.append(xp)
        in_specs.append(pl.BlockSpec((tile, p * Cb), lambda i, d: (i, 0)))

    # ---- PatchMerging constants (LN + Linear split along the 4C axis) ------
    if fuse_merge:
        g, bln, wm, blin = merge                 # (1,4C),(1,4C),(4C,2C)bf16,(1,2C)
        for a in (g[:, :Cb], g[:, Cb:], bln[:, :Cb], bln[:, Cb:],
                  wm[:Cb], wm[Cb:], blin):
            add_const(a)

    # ---- Swin block constants ----------------------------------------------
    slice_w = False
    if depth > 0:
        if use_seg:
            add_const(jnp.kron(jnp.eye(p, dtype=jnp.float32),
                               jnp.ones((Cb, Cb), jnp.float32)) / Cb)
            tile_vec = lambda a: jnp.tile(a, (1, 1, p))
            eye_b = jnp.eye(p, dtype=jnp.bfloat16)
            pack_w = lambda w: jnp.einsum("ij,dkl->dikjl", eye_b, w).reshape(
                w.shape[0], p * w.shape[1], p * w.shape[2])   # block-diagonal
            g1, b1 = tile_vec(blk["g1"]), tile_vec(blk["b1"])
            g2, b2 = tile_vec(blk["g2"]), tile_vec(blk["b2"])
            w1, w2 = pack_w(blk["w1"]), pack_w(blk["w2"])
            bb1, bb2 = tile_vec(blk["bb1"]), tile_vec(blk["bb2"])
        else:
            g1, b1, g2, b2 = blk["g1"], blk["b1"], blk["g2"], blk["b2"]
            w1, w2, bb1, bb2 = blk["w1"], blk["w2"], blk["bb1"], blk["bb2"]

        for a in (g1, b1, g2, b2):
            add_const(a)

        # Keep the whole depth-stack of weights resident when cheap; otherwise
        # depth-slice so only the current (+ prefetched next) block's weights
        # occupy VMEM -- critical on v7x's 64 MiB (review item #2).
        w_bytes = 2 * (w1.size + w2.size) * w1.dtype.itemsize
        slice_w = depth > 1 and w_bytes > cfg["w_resident_bytes"]

        def add_weight(a):
            operands.append(a)
            if slice_w:
                in_specs.append(pl.BlockSpec((1,) + tuple(a.shape[1:]),
                                             lambda i, d: (d, 0, 0)))
            else:
                zeros = (0,) * a.ndim
                in_specs.append(pl.BlockSpec(a.shape,
                                             lambda i, d, _z=zeros: _z))

        add_weight(w1); add_const(bb1); add_weight(w2); add_const(bb2)

    # ---- output (lane-dense packed rows) ------------------------------------
    out_rows = ntok // p
    rows_per_tile = (tile * tok_per_item) // p
    out_shape = jax.ShapeDtypeStruct((out_rows, p * Cb), jnp.float32)
    out_spec = pl.BlockSpec((rows_per_tile, p * Cb), lambda i, d: (i, 0))

    grid = (n_items // tile, max(depth, 1))
    kernel = _make_stack_kernel(fuse_merge=fuse_merge, depth=depth,
                                use_seg=use_seg, slice_w=slice_w)

    out = pl.pallas_call(
        kernel,
        out_shape=out_shape,
        grid=grid,
        in_specs=in_specs,
        out_specs=out_spec,
        compiler_params=_compiler_params(("parallel", "arbitrary"), cfg),
    )(*operands)
    return out.reshape(B, Ho, Wo, Cb)            # free reshape back to NHWC


# ----------------------------------------------------------------------------
# PatchExpanding: Linear(C, 2C, no bias) + pixel-shuffle + LayerNorm(C/2),
# fused.  Output laid out as (B*H, 2, W, 2*C2) so the host un-shuffle to
# (B, 2H, 2W, C2) is a free contiguous reshape.  The per-(C/2)-segment
# LayerNorm uses the MXU block-mean matmul (keeps the XLU idle).
# TODO(synk): lane-dense packing of this output (last dim = C < 128), like the
# fused block-stack path, would remove its masked partial stores.
# ----------------------------------------------------------------------------
def _patch_expand_kernel(x_ref, wl_ref, mseg_ref, g_ref, b_ref, o_ref):
    tb, w, c = x_ref.shape
    y = jnp.dot(x_ref[...].reshape(tb * w, c).astype(jnp.bfloat16), wl_ref[...],
                preferred_element_type=jnp.float32)            # (tb*W, 2C)
    yn = _ln_seg(y, g_ref[...], b_ref[...], mseg_ref[...])     # per-C/2-seg LN
    yn = yn.reshape(tb, w, 2 * c)                              # lanes=(s1,s2,c)
    o_ref[:, 0] = yn[..., :c]                                  # output rows 2h
    o_ref[:, 1] = yn[..., c:]                                  # output rows 2h+1


def _patch_expanding(x, patch_params):
    cfg = _tpu_config()
    B, H, W, C = x.shape
    wl, g, b = patch_params                      # (C,2C) bf16, (1,C/2), (1,C/2)
    C2 = C // 2

    xr = x.reshape(B * H, W, C)                  # free reshape
    nb = B * H
    mseg = jnp.kron(jnp.eye(4, dtype=jnp.float32),
                    jnp.ones((C2, C2), jnp.float32)) / C2      # (2C, 2C)
    g4, b4 = jnp.tile(g, (1, 4)), jnp.tile(b, (1, 4))

    item_bytes = 4 * W * (C + 6 * C)
    tb = _pick_tile(nb, item_bytes, cfg, sublane_align=False)
    grid = (nb // tb,)

    out = pl.pallas_call(
        _patch_expand_kernel,
        out_shape=jax.ShapeDtypeStruct((nb, 2, W, 2 * C2), jnp.float32),
        grid=grid,
        in_specs=[pl.BlockSpec((tb, W, C), lambda i: (i, 0, 0)),
                  pl.BlockSpec(wl.shape, lambda i: (0, 0)),
                  pl.BlockSpec(mseg.shape, lambda i: (0, 0)),
                  pl.BlockSpec(g4.shape, lambda i: (0, 0)),
                  pl.BlockSpec(b4.shape, lambda i: (0, 0))],
        out_specs=pl.BlockSpec((tb, 2, W, 2 * C2), lambda i: (i, 0, 0, 0)),
        compiler_params=_compiler_params(("parallel",), cfg),
    )(xr, wl, mseg, g4, b4)
    return out.reshape(B, 2 * H, 2 * W, C2)      # free reshape


# ----------------------------------------------------------------------------
# Parameter initialization (deterministic, torch-default-style uniform).
# Matmul weights are stored in bf16 (MXU operands); LN params / biases in f32.
# (Stated numerics caveat: weights are bf16-rounded at init; the pure-JAX
#  reference uses the same rounded weights, so tolerance covers only the
#  activation-side bf16 casts.)
# ----------------------------------------------------------------------------
def _init_linear(key, fan_in, fan_out, bias=True):
    kw, kb = jax.random.split(key)
    lim = 1.0 / (fan_in ** 0.5)
    W = jax.random.uniform(kw, (fan_in, fan_out), jnp.float32, -lim, lim)
    b = (jax.random.uniform(kb, (1, fan_out), jnp.float32, -lim, lim)
         if bias else None)
    return W, b


def init_swin_transformer_params(key, in_dim, depth, mlp_factor, downsample):
    params = {"patch": None, "blocks": None}

    if downsample == 0:                       # PatchMerging(in_dim)
        swin_in_dim = 2 * in_dim
        g = jnp.ones((1, 4 * in_dim), jnp.float32)
        b = jnp.zeros((1, 4 * in_dim), jnp.float32)
        key, k = jax.random.split(key)
        wm, bm = _init_linear(k, 4 * in_dim, 2 * in_dim, bias=True)
        params["patch"] = (g, b, wm.astype(jnp.bfloat16), bm)
    elif downsample == 1:                     # PatchExpanding(in_dim)
        swin_in_dim = in_dim // 2
        key, k = jax.random.split(key)
        wl, _ = _init_linear(k, in_dim, 2 * in_dim, bias=False)
        g = jnp.ones((1, in_dim // 2), jnp.float32)
        b = jnp.zeros((1, in_dim // 2), jnp.float32)
        params["patch"] = (wl.astype(jnp.bfloat16), g, b)
    else:
        swin_in_dim = in_dim

    hid = int(swin_in_dim * mlp_factor)
    if depth > 0:
        acc = {k: [] for k in ("g1", "b1", "g2", "b2", "w1", "bb1", "w2", "bb2")}
        for _ in range(depth):
            key, k1, k2 = jax.random.split(key, 3)
            w1, bb1 = _init_linear(k1, swin_in_dim, hid, bias=True)
            w2, bb2 = _init_linear(k2, hid, swin_in_dim, bias=True)
            acc["g1"].append(jnp.ones((1, swin_in_dim), jnp.float32))
            acc["b1"].append(jnp.zeros((1, swin_in_dim), jnp.float32))
            acc["g2"].append(jnp.ones((1, swin_in_dim), jnp.float32))
            acc["b2"].append(jnp.zeros((1, swin_in_dim), jnp.float32))
            acc["w1"].append(w1.astype(jnp.bfloat16))
            acc["bb1"].append(bb1)
            acc["w2"].append(w2.astype(jnp.bfloat16))
            acc["bb2"].append(bb2)
        params["blocks"] = {k: jnp.stack(v, axis=0) for k, v in acc.items()}
    return params, swin_in_dim, hid


# ----------------------------------------------------------------------------
# Forward pass
# ----------------------------------------------------------------------------
def swin_transformer_forward(x, params, downsample):
    blocks = params["blocks"]
    if downsample == 0:
        # PatchMerging fused into the block-stack kernel (no HBM round trip).
        return _swin_stack(x, params["patch"], blocks)
    if downsample == 1:
        x = _patch_expanding(x, params["patch"])
    if blocks is not None:
        x = _swin_stack(x, None, blocks)
    return x


# ----------------------------------------------------------------------------
# Pure-JAX reference (same dead-attention semantics) for a correctness check.
# ----------------------------------------------------------------------------
def _reference_forward(x, params, downsample):
    if downsample == 0:
        g, b, wm, bm = params["patch"]
        parts = [x[:, hs::2, ws::2, :] for hs in (0, 1) for ws in (0, 1)]
        xc = jnp.concatenate(parts, axis=-1)
        xn = _ln(xc, g, b)
        x = jnp.einsum("bhwc,cd->bhwd", xn, wm.astype(jnp.float32)) + bm
    elif downsample == 1:
        wl, g, b = params["patch"]
        B, H, W, C = x.shape
        C2 = C // 2
        y = jnp.einsum("bhwc,cd->bhwd", x, wl.astype(jnp.float32))
        y = (y.reshape(B, H, W, 2, 2, C2)
              .transpose(0, 1, 3, 2, 4, 5)
              .reshape(B, 2 * H, 2 * W, C2))
        x = _ln(y, g, b)

    if params["blocks"] is not None:
        blk = params["blocks"]
        for d in range(blk["g1"].shape[0]):
            y = x + _ln(x, blk["g1"][d], blk["b1"][d])
            h = _gelu_tanh(
                jnp.einsum("...c,cd->...d", _ln(y, blk["g2"][d], blk["b2"][d]),
                           blk["w1"][d].astype(jnp.float32)) + blk["bb1"][d])
            x = y + (jnp.einsum("...c,cd->...d", h,
                                blk["w2"][d].astype(jnp.float32)) + blk["bb2"][d])
    return x


# ----------------------------------------------------------------------------
if __name__ == "__main__":
    _tpu_config()          # prime the hardware query outside jit tracing
    key = jax.random.PRNGKey(0)

    # SwinTransformer(in_dim=16, img_shape=(16,16), depth=2, n_heads=2,
    #                 wdw_size=4, mlp_factor=4.0, drop_path=[0.0]*2, downsample=0)
    B, H, W, C = 2, 16, 16, 16
    depth, mlp_factor, downsample = 2, 4.0, 0

    key, kx, kp = jax.random.split(key, 3)
    x = jax.random.normal(kx, (B, H, W, C), jnp.float32)

    params, swin_in_dim, hid = init_swin_transformer_params(
        kp, in_dim=C, depth=depth, mlp_factor=mlp_factor, downsample=downsample)

    fwd = jax.jit(swin_transformer_forward, static_argnums=2)
    y = fwd(x, params, downsample)
    jax.block_until_ready(y)

    expected_shape = (B, H // 2, W // 2, 2 * C)
    assert y.shape == expected_shape, (y.shape, expected_shape)

    # correctness vs. f32 reference (bf16 MXU operands -> loose tolerance)
    ref = _reference_forward(x, params, downsample)
    ok = bool(jnp.all(jnp.abs(y - ref) <= 5e-2 + 5e-2 * jnp.abs(ref)))
    assert ok, float(jnp.max(jnp.abs(y - ref)))

    print("KERNEL_OK")
</pallas_src>

<mosaic_0001>
module attributes {stable_mosaic.version = 11 : i64} {
  func.func @kernel(%arg0: i32, %arg1: i32, %arg2: memref<8x2x8x32xf32, #tpu.memory_space<vmem>>, %arg3: memref<1x32xf32, #tpu.memory_space<vmem>>, %arg4: memref<1x32xf32, #tpu.memory_space<vmem>>, %arg5: memref<1x32xf32, #tpu.memory_space<vmem>>, %arg6: memref<1x32xf32, #tpu.memory_space<vmem>>, %arg7: memref<32x32xbf16, #tpu.memory_space<vmem>>, %arg8: memref<32x32xbf16, #tpu.memory_space<vmem>>, %arg9: memref<1x32xf32, #tpu.memory_space<vmem>>, %arg10: memref<128x128xf32, #tpu.memory_space<vmem>>, %arg11: memref<2x1x128xf32, #tpu.memory_space<vmem>>, %arg12: memref<2x1x128xf32, #tpu.memory_space<vmem>>, %arg13: memref<2x1x128xf32, #tpu.memory_space<vmem>>, %arg14: memref<2x1x128xf32, #tpu.memory_space<vmem>>, %arg15: memref<2x128x512xbf16, #tpu.memory_space<vmem>>, %arg16: memref<2x1x512xf32, #tpu.memory_space<vmem>>, %arg17: memref<2x512x128xbf16, #tpu.memory_space<vmem>>, %arg18: memref<2x1x128xf32, #tpu.memory_space<vmem>>, %arg19: memref<16x128xf32, #tpu.memory_space<vmem>>) attributes {dimension_semantics = [#tpu.dimension_semantics<parallel>, #tpu.dimension_semantics<arbitrary>], iteration_bounds = array<i64: 2, 2>, scalar_prefetch = 0 : i64, scratch_operands = 0 : i64, tpu.core_type = #tpu.core_type<tc>, window_params = [{transform_indices = @transform_0, window_bounds = array<i64: 8, 2, 8, 32>}, {pipeline_mode = #tpu.pipeline_mode<synchronous>, transform_indices = @transform_1, window_bounds = array<i64: 1, 32>}, {pipeline_mode = #tpu.pipeline_mode<synchronous>, transform_indices = @transform_2, window_bounds = array<i64: 1, 32>}, {pipeline_mode = #tpu.pipeline_mode<synchronous>, transform_indices = @transform_3, window_bounds = array<i64: 1, 32>}, {pipeline_mode = #tpu.pipeline_mode<synchronous>, transform_indices = @transform_4, window_bounds = array<i64: 1, 32>}, {pipeline_mode = #tpu.pipeline_mode<synchronous>, transform_indices = @transform_5, window_bounds = array<i64: 32, 32>}, {pipeline_mode = #tpu.pipeline_mode<synchronous>, transform_indices = @transform_6, window_bounds = array<i64: 32, 32>}, {pipeline_mode = #tpu.pipeline_mode<synchronous>, transform_indices = @transform_7, window_bounds = array<i64: 1, 32>}, {pipeline_mode = #tpu.pipeline_mode<synchronous>, transform_indices = @transform_8, window_bounds = array<i64: 128, 128>}, {pipeline_mode = #tpu.pipeline_mode<synchronous>, transform_indices = @transform_9, window_bounds = array<i64: 2, 1, 128>}, {pipeline_mode = #tpu.pipeline_mode<synchronous>, transform_indices = @transform_10, window_bounds = array<i64: 2, 1, 128>}, {pipeline_mode = #tpu.pipeline_mode<synchronous>, transform_indices = @transform_11, window_bounds = array<i64: 2, 1, 128>}, {pipeline_mode = #tpu.pipeline_mode<synchronous>, transform_indices = @transform_12, window_bounds = array<i64: 2, 1, 128>}, {pipeline_mode = #tpu.pipeline_mode<synchronous>, transform_indices = @transform_13, window_bounds = array<i64: 2, 128, 512>}, {pipeline_mode = #tpu.pipeline_mode<synchronous>, transform_indices = @transform_14, window_bounds = array<i64: 2, 1, 512>}, {pipeline_mode = #tpu.pipeline_mode<synchronous>, transform_indices = @transform_15, window_bounds = array<i64: 2, 512, 128>}, {pipeline_mode = #tpu.pipeline_mode<synchronous>, transform_indices = @transform_16, window_bounds = array<i64: 2, 1, 128>}, {transform_indices = @transform_17, window_bounds = array<i64: 16, 128>}]} {
    %c0_i32 = arith.constant 0 : i32
    %0 = arith.cmpi eq, %arg1, %c0_i32 : i32
    %1 = arith.extui %0 : i1 to i32
    %c0_i32_0 = arith.constant 0 : i32
    %2 = arith.cmpi ne, %1, %c0_i32_0 : i32
    scf.if %2 {
      %c0_33 = arith.constant 0 : index
      %c0_34 = arith.constant 0 : index
      %c0_35 = arith.constant 0 : index
      %c0_36 = arith.constant 0 : index
      %79 = vector.load %arg2[%c0_33, %c0_34, %c0_35, %c0_36] : memref<8x2x8x32xf32, #tpu.memory_space<vmem>>, vector<8x2x8x32xf32>
      %80 = vector.extract_strided_slice %79 {offsets = [0, 0, 0, 0], sizes = [8, 1, 8, 32], strides = [1, 1, 1, 1]} : vector<8x2x8x32xf32> to vector<8x1x8x32xf32>
      %81 = vector.shape_cast %80 : vector<8x1x8x32xf32> to vector<8x8x32xf32>
      %82 = vector.shape_cast %81 : vector<8x8x32xf32> to vector<64x32xf32>
      %83 = vector.extract_strided_slice %79 {offsets = [0, 1, 0, 0], sizes = [8, 1, 8, 32], strides = [1, 1, 1, 1]} : vector<8x2x8x32xf32> to vector<8x1x8x32xf32>
      %84 = vector.shape_cast %83 : vector<8x1x8x32xf32> to vector<8x8x32xf32>
      %85 = vector.shape_cast %84 : vector<8x8x32xf32> to vector<64x32xf32>
      %cst_37 = arith.constant dense<0.000000e+00> : vector<64xf32>
      %86 = vector.multi_reduction <add>, %82, %cst_37 [1] : vector<64x32xf32> to vector<64xf32>
      %87 = vector.shape_cast %86 : vector<64xf32> to vector<64x1xf32>
      %cst_38 = arith.constant dense<0.000000e+00> : vector<64xf32>
      %88 = vector.multi_reduction <add>, %85, %cst_38 [1] : vector<64x32xf32> to vector<64xf32>
      %89 = vector.shape_cast %88 : vector<64xf32> to vector<64x1xf32>
      %90 = arith.addf %87, %89 : vector<64x1xf32>
      %cst_39 = arith.constant 1.562500e-02 : f32
      %91 = vector.broadcast %cst_39 : f32 to vector<64x1xf32>
      %92 = arith.mulf %90, %91 : vector<64x1xf32>
      %93 = vector.broadcast %92 : vector<64x1xf32> to vector<64x32xf32>
      %94 = arith.subf %82, %93 : vector<64x32xf32>
      %95 = arith.mulf %94, %94 : vector<64x32xf32>
      %cst_40 = arith.constant dense<0.000000e+00> : vector<64xf32>
      %96 = vector.multi_reduction <add>, %95, %cst_40 [1] : vector<64x32xf32> to vector<64xf32>
      %97 = vector.shape_cast %96 : vector<64xf32> to vector<64x1xf32>
      %98 = vector.broadcast %92 : vector<64x1xf32> to vector<64x32xf32>
      %99 = arith.subf %85, %98 : vector<64x32xf32>
      %100 = arith.mulf %99, %99 : vector<64x32xf32>
      %cst_41 = arith.constant dense<0.000000e+00> : vector<64xf32>
      %101 = vector.multi_reduction <add>, %100, %cst_41 [1] : vector<64x32xf32> to vector<64xf32>
      %102 = vector.shape_cast %101 : vector<64xf32> to vector<64x1xf32>
      %103 = arith.addf %97, %102 : vector<64x1xf32>
      %cst_42 = arith.constant 1.562500e-02 : f32
      %104 = vector.broadcast %cst_42 : f32 to vector<64x1xf32>
      %105 = arith.mulf %103, %104 : vector<64x1xf32>
      %cst_43 = arith.constant 9.99999974E-6 : f32
      %106 = vector.broadcast %cst_43 : f32 to vector<64x1xf32>
      %107 = arith.addf %105, %106 : vector<64x1xf32>
      %108 = math.rsqrt %107 : vector<64x1xf32>
      %109 = vector.broadcast %92 : vector<64x1xf32> to vector<64x32xf32>
      %110 = arith.subf %82, %109 : vector<64x32xf32>
      %111 = vector.broadcast %108 : vector<64x1xf32> to vector<64x32xf32>
      %112 = arith.mulf %110, %111 : vector<64x32xf32>
      %c0_44 = arith.constant 0 : index
      %c0_45 = arith.constant 0 : index
      %113 = vector.load %arg3[%c0_44, %c0_45] : memref<1x32xf32, #tpu.memory_space<vmem>>, vector<1x32xf32>
      %114 = vector.broadcast %113 : vector<1x32xf32> to vector<64x32xf32>
      %115 = arith.mulf %112, %114 : vector<64x32xf32>
      %c0_46 = arith.constant 0 : index
      %c0_47 = arith.constant 0 : index
      %116 = vector.load %arg5[%c0_46, %c0_47] : memref<1x32xf32, #tpu.memory_space<vmem>>, vector<1x32xf32>
      %117 = vector.broadcast %116 : vector<1x32xf32> to vector<64x32xf32>
      %118 = arith.addf %115, %117 : vector<64x32xf32>
      %119 = vector.broadcast %92 : vector<64x1xf32> to vector<64x32xf32>
      %120 = arith.subf %85, %119 : vector<64x32xf32>
      %121 = vector.broadcast %108 : vector<64x1xf32> to vector<64x32xf32>
      %122 = arith.mulf %120, %121 : vector<64x32xf32>
      %c0_48 = arith.constant 0 : index
      %c0_49 = arith.constant 0 : index
      %123 = vector.load %arg4[%c0_48, %c0_49] : memref<1x32xf32, #tpu.memory_space<vmem>>, vector<1x32xf32>
      %124 = vector.broadcast %123 : vector<1x32xf32> to vector<64x32xf32>
      %125 = arith.mulf %122, %124 : vector<64x32xf32>
      %c0_50 = arith.constant 0 : index
      %c0_51 = arith.constant 0 : index
      %126 = vector.load %arg6[%c0_50, %c0_51] : memref<1x32xf32, #tpu.memory_space<vmem>>, vector<1x32xf32>
      %127 = vector.broadcast %126 : vector<1x32xf32> to vector<64x32xf32>
      %128 = arith.addf %125, %127 : vector<64x32xf32>
      %129 = arith.truncf %118 : vector<64x32xf32> to vector<64x32xbf16>
      %c0_52 = arith.constant 0 : index
      %c0_53 = arith.constant 0 : index
      %130 = vector.load %arg7[%c0_52, %c0_53] : memref<32x32xbf16, #tpu.memory_space<vmem>>, vector<32x32xbf16>
      %cst_54 = arith.constant dense<0.000000e+00> : vector<64x32xf32>
      %131 = tpu.matmul %129, %130, %cst_54 {dimension_numbers = #tpu.dot_dimension_numbers<[1], [0], [0], [1], [0, 0, 1, 1], [], []>} : vector<64x32xbf16>, vector<32x32xbf16>, vector<64x32xf32> -> vector<64x32xf32>
      %132 = arith.truncf %128 : vector<64x32xf32> to vector<64x32xbf16>
      %c0_55 = arith.constant 0 : index
      %c0_56 = arith.constant 0 : index
      %133 = vector.load %arg8[%c0_55, %c0_56] : memref<32x32xbf16, #tpu.memory_space<vmem>>, vector<32x32xbf16>
      %cst_57 = arith.constant dense<0.000000e+00> : vector<64x32xf32>
      %134 = tpu.matmul %132, %133, %cst_57 {dimension_numbers = #tpu.dot_dimension_numbers<[1], [0], [0], [1], [0, 0, 1, 1], [], []>} : vector<64x32xbf16>, vector<32x32xbf16>, vector<64x32xf32> -> vector<64x32xf32>
      %135 = arith.addf %131, %134 : vector<64x32xf32>
      %c0_58 = arith.constant 0 : index
      %c0_59 = arith.constant 0 : index
      %136 = vector.load %arg9[%c0_58, %c0_59] : memref<1x32xf32, #tpu.memory_space<vmem>>, vector<1x32xf32>
      %137 = vector.broadcast %136 : vector<1x32xf32> to vector<64x32xf32>
      %138 = arith.addf %135, %137 : vector<64x32xf32>
      %139 = vector.shape_cast %138 : vector<64x32xf32> to vector<16x4x32xf32>
      %140 = vector.extract_strided_slice %139 {offsets = [0, 0, 0], sizes = [16, 1, 32], strides = [1, 1, 1]} : vector<16x4x32xf32> to vector<16x1x32xf32>
      %141 = vector.shape_cast %140 : vector<16x1x32xf32> to vector<16x32xf32>
      %142 = vector.extract_strided_slice %139 {offsets = [0, 1, 0], sizes = [16, 1, 32], strides = [1, 1, 1]} : vector<16x4x32xf32> to vector<16x1x32xf32>
      %143 = vector.shape_cast %142 : vector<16x1x32xf32> to vector<16x32xf32>
      %144 = vector.extract_strided_slice %139 {offsets = [0, 2, 0], sizes = [16, 1, 32], strides = [1, 1, 1]} : vector<16x4x32xf32> to vector<16x1x32xf32>
      %145 = vector.shape_cast %144 : vector<16x1x32xf32> to vector<16x32xf32>
      %146 = vector.extract_strided_slice %139 {offsets = [0, 3, 0], sizes = [16, 1, 32], strides = [1, 1, 1]} : vector<16x4x32xf32> to vector<16x1x32xf32>
      %147 = vector.shape_cast %146 : vector<16x1x32xf32> to vector<16x32xf32>
      %148 = tpu.concatenate %141, %143, %145, %147 in 1 : vector<16x32xf32>, vector<16x32xf32>, vector<16x32xf32>, vector<16x32xf32> -> vector<16x128xf32>
      %c0_60 = arith.constant 0 : index
      %c0_61 = arith.constant 0 : index
      %149 = vector.load %arg19[%c0_60, %c0_61] : memref<16x128xf32, #tpu.memory_space<vmem>>, vector<16x128xf32>
      tpu.vector_store %arg19[%c0_60, %c0_61], %148 {strides = array<i32>} : memref<16x128xf32, #tpu.memory_space<vmem>>, vector<16x128xf32>,
    } else {
    }
    %c0 = arith.constant 0 : index
    %c0_1 = arith.constant 0 : index
    %3 = vector.load %arg10[%c0, %c0_1] : memref<128x128xf32, #tpu.memory_space<vmem>>, vector<128x128xf32>
    %c0_2 = arith.constant 0 : index
    %c0_3 = arith.constant 0 : index
    %4 = vector.load %arg19[%c0_2, %c0_3] : memref<16x128xf32, #tpu.memory_space<vmem>>, vector<16x128xf32>
    %5 = arith.index_cast %arg1 : i32 to index
    %c0_4 = arith.constant 0 : index
    %c0_5 = arith.constant 0 : index
    %6 = vector.load %arg11[%5, %c0_4, %c0_5] : memref<2x1x128xf32, #tpu.memory_space<vmem>>, vector<1x1x128xf32>
    %7 = vector.shape_cast %6 : vector<1x1x128xf32> to vector<1x128xf32>
    %8 = arith.index_cast %arg1 : i32 to index
    %c0_6 = arith.constant 0 : index
    %c0_7 = arith.constant 0 : index
    %9 = vector.load %arg12[%8, %c0_6, %c0_7] : memref<2x1x128xf32, #tpu.memory_space<vmem>>, vector<1x1x128xf32>
    %10 = vector.shape_cast %9 : vector<1x1x128xf32> to vector<1x128xf32>
    %cst = arith.constant dense<0.000000e+00> : vector<16x128xf32>
    %11 = tpu.matmul %4, %3, %cst {dimension_numbers = #tpu.dot_dimension_numbers<[1], [0], [0], [1], [0, 0, 1, 1], [], []>} : vector<16x128xf32>, vector<128x128xf32>, vector<16x128xf32> -> vector<16x128xf32>
    %12 = arith.subf %4, %11 : vector<16x128xf32>
    %13 = arith.mulf %12, %12 : vector<16x128xf32>
    %cst_8 = arith.constant dense<0.000000e+00> : vector<16x128xf32>
    %14 = tpu.matmul %13, %3, %cst_8 {dimension_numbers = #tpu.dot_dimension_numbers<[1], [0], [0], [1], [0, 0, 1, 1], [], []>} : vector<16x128xf32>, vector<128x128xf32>, vector<16x128xf32> -> vector<16x128xf32>
    %15 = arith.subf %4, %11 : vector<16x128xf32>
    %cst_9 = arith.constant 9.99999974E-6 : f32
    %16 = vector.broadcast %cst_9 : f32 to vector<16x128xf32>
    %17 = arith.addf %14, %16 : vector<16x128xf32>
    %18 = math.rsqrt %17 : vector<16x128xf32>
    %19 = arith.mulf %15, %18 : vector<16x128xf32>
    %20 = vector.broadcast %7 : vector<1x128xf32> to vector<16x128xf32>
    %21 = arith.mulf %19, %20 : vector<16x128xf32>
    %22 = vector.broadcast %10 : vector<1x128xf32> to vector<16x128xf32>
    %23 = arith.addf %21, %22 : vector<16x128xf32>
    %24 = arith.addf %4, %23 : vector<16x128xf32>
    %25 = arith.index_cast %arg1 : i32 to index
    %c0_10 = arith.constant 0 : index
    %c0_11 = arith.constant 0 : index
    %26 = vector.load %arg13[%25, %c0_10, %c0_11] : memref<2x1x128xf32, #tpu.memory_space<vmem>>, vector<1x1x128xf32>
    %27 = vector.shape_cast %26 : vector<1x1x128xf32> to vector<1x128xf32>
    %28 = arith.index_cast %arg1 : i32 to index
    %c0_12 = arith.constant 0 : index
    %c0_13 = arith.constant 0 : index
    %29 = vector.load %arg14[%28, %c0_12, %c0_13] : memref<2x1x128xf32, #tpu.memory_space<vmem>>, vector<1x1x128xf32>
    %30 = vector.shape_cast %29 : vector<1x1x128xf32> to vector<1x128xf32>
    %cst_14 = arith.constant dense<0.000000e+00> : vector<16x128xf32>
    %31 = tpu.matmul %24, %3, %cst_14 {dimension_numbers = #tpu.dot_dimension_numbers<[1], [0], [0], [1], [0, 0, 1, 1], [], []>} : vector<16x128xf32>, vector<128x128xf32>, vector<16x128xf32> -> vector<16x128xf32>
    %32 = arith.subf %24, %31 : vector<16x128xf32>
    %33 = arith.mulf %32, %32 : vector<16x128xf32>
    %cst_15 = arith.constant dense<0.000000e+00> : vector<16x128xf32>
    %34 = tpu.matmul %33, %3, %cst_15 {dimension_numbers = #tpu.dot_dimension_numbers<[1], [0], [0], [1], [0, 0, 1, 1], [], []>} : vector<16x128xf32>, vector<128x128xf32>, vector<16x128xf32> -> vector<16x128xf32>
    %35 = arith.subf %24, %31 : vector<16x128xf32>
    %cst_16 = arith.constant 9.99999974E-6 : f32
    %36 = vector.broadcast %cst_16 : f32 to vector<16x128xf32>
    %37 = arith.addf %34, %36 : vector<16x128xf32>
    %38 = math.rsqrt %37 : vector<16x128xf32>
    %39 = arith.mulf %35, %38 : vector<16x128xf32>
    %40 = vector.broadcast %27 : vector<1x128xf32> to vector<16x128xf32>
    %41 = arith.mulf %39, %40 : vector<16x128xf32>
    %42 = vector.broadcast %30 : vector<1x128xf32> to vector<16x128xf32>
    %43 = arith.addf %41, %42 : vector<16x128xf32>
    %44 = arith.truncf %43 : vector<16x128xf32> to vector<16x128xbf16>
    %45 = arith.index_cast %arg1 : i32 to index
    %c0_17 = arith.constant 0 : index
    %c0_18 = arith.constant 0 : index
    %46 = vector.load %arg15[%45, %c0_17, %c0_18] : memref<2x128x512xbf16, #tpu.memory_space<vmem>>, vector<1x128x512xbf16>
    %47 = vector.shape_cast %46 : vector<1x128x512xbf16> to vector<128x512xbf16>
    %cst_19 = arith.constant dense<0.000000e+00> : vector<16x512xf32>
    %48 = tpu.matmul %44, %47, %cst_19 {dimension_numbers = #tpu.dot_dimension_numbers<[1], [0], [0], [1], [0, 0, 1, 1], [], []>} : vector<16x128xbf16>, vector<128x512xbf16>, vector<16x512xf32> -> vector<16x512xf32>
    %49 = arith.index_cast %arg1 : i32 to index
    %c0_20 = arith.constant 0 : index
    %c0_21 = arith.constant 0 : index
    %50 = vector.load %arg16[%49, %c0_20, %c0_21] : memref<2x1x512xf32, #tpu.memory_space<vmem>>, vector<1x1x512xf32>
    %51 = vector.shape_cast %50 : vector<1x1x512xf32> to vector<1x512xf32>
    %52 = vector.broadcast %51 : vector<1x512xf32> to vector<16x512xf32>
    %53 = arith.addf %48, %52 : vector<16x512xf32>
    %cst_22 = arith.constant 5.000000e-01 : f32
    %54 = vector.broadcast %cst_22 : f32 to vector<16x512xf32>
    %55 = arith.mulf %54, %53 : vector<16x512xf32>
    %cst_23 = arith.constant 4.471500e-02 : f32
    %56 = vector.broadcast %cst_23 : f32 to vector<16x512xf32>
    %57 = arith.mulf %56, %53 : vector<16x512xf32>
    %58 = arith.mulf %57, %53 : vector<16x512xf32>
    %59 = arith.mulf %58, %53 : vector<16x512xf32>
    %60 = arith.addf %53, %59 : vector<16x512xf32>
    %cst_24 = arith.constant 0.797884583 : f32
    %61 = vector.broadcast %cst_24 : f32 to vector<16x512xf32>
    %62 = arith.mulf %61, %60 : vector<16x512xf32>
    %63 = math.tanh %62 : vector<16x512xf32>
    %cst_25 = arith.constant 1.000000e+00 : f32
    %64 = vector.broadcast %cst_25 : f32 to vector<16x512xf32>
    %65 = arith.addf %64, %63 : vector<16x512xf32>
    %66 = arith.mulf %55, %65 : vector<16x512xf32>
    %67 = arith.truncf %66 : vector<16x512xf32> to vector<16x512xbf16>
    %68 = arith.index_cast %arg1 : i32 to index
    %c0_26 = arith.constant 0 : index
    %c0_27 = arith.constant 0 : index
    %69 = vector.load %arg17[%68, %c0_26, %c0_27] : memref<2x512x128xbf16, #tpu.memory_space<vmem>>, vector<1x512x128xbf16>
    %70 = vector.shape_cast %69 : vector<1x512x128xbf16> to vector<512x128xbf16>
    %cst_28 = arith.constant dense<0.000000e+00> : vector<16x128xf32>
    %71 = tpu.matmul %67, %70, %cst_28 {dimension_numbers = #tpu.dot_dimension_numbers<[1], [0], [0], [1], [0, 0, 1, 1], [], []>} : vector<16x512xbf16>, vector<512x128xbf16>, vector<16x128xf32> -> vector<16x128xf32>
    %72 = arith.addf %24, %71 : vector<16x128xf32>
    %73 = arith.index_cast %arg1 : i32 to index
    %c0_29 = arith.constant 0 : index
    %c0_30 = arith.constant 0 : index
    %74 = vector.load %arg18[%73, %c0_29, %c0_30] : memref<2x1x128xf32, #tpu.memory_space<vmem>>, vector<1x1x128xf32>
    %75 = vector.shape_cast %74 : vector<1x1x128xf32> to vector<1x128xf32>
    %76 = vector.broadcast %75 : vector<1x128xf32> to vector<16x128xf32>
    %77 = arith.addf %72, %76 : vector<16x128xf32>
    %c0_31 = arith.constant 0 : index
    %c0_32 = arith.constant 0 : index
    %78 = vector.load %arg19[%c0_31, %c0_32] : memref<16x128xf32, #tpu.memory_space<vmem>>, vector<16x128xf32>
    tpu.vector_store %arg19[%c0_31, %c0_32], %77 {strides = array<i32>} : memref<16x128xf32, #tpu.memory_space<vmem>>, vector<16x128xf32>,
    return
  }
  func.func @transform_0(%arg0: i32, %arg1: i32) -> (i32, i32, i32, i32) {
    %c0_i32 = arith.constant 0 : i32
    %c0_i32_0 = arith.constant 0 : i32
    %c0_i32_1 = arith.constant 0 : i32
    %c0_i32_2 = arith.constant 0 : i32
    return %arg0, %c0_i32, %c0_i32_0, %c0_i32_1 : i32, i32, i32, i32
  }
  func.func @transform_1(%arg0: i32, %arg1: i32) -> (i32, i32) {
    %c0_i32 = arith.constant 0 : i32
    %c0_i32_0 = arith.constant 0 : i32
    %c0_i32_1 = arith.constant 0 : i32
    return %c0_i32, %c0_i32_0 : i32, i32
  }
  func.func @transform_2(%arg0: i32, %arg1: i32) -> (i32, i32) {
    %c0_i32 = arith.constant 0 : i32
    %c0_i32_0 = arith.constant 0 : i32
    %c0_i32_1 = arith.constant 0 : i32
    return %c0_i32, %c0_i32_0 : i32, i32
  }
  func.func @transform_3(%arg0: i32, %arg1: i32) -> (i32, i32) {
    %c0_i32 = arith.constant 0 : i32
    %c0_i32_0 = arith.constant 0 : i32
    %c0_i32_1 = arith.constant 0 : i32
    return %c0_i32, %c0_i32_0 : i32, i32
  }
  func.func @transform_4(%arg0: i32, %arg1: i32) -> (i32, i32) {
    %c0_i32 = arith.constant 0 : i32
    %c0_i32_0 = arith.constant 0 : i32
    %c0_i32_1 = arith.constant 0 : i32
    return %c0_i32, %c0_i32_0 : i32, i32
  }
  func.func @transform_5(%arg0: i32, %arg1: i32) -> (i32, i32) {
    %c0_i32 = arith.constant 0 : i32
    %c0_i32_0 = arith.constant 0 : i32
    %c0_i32_1 = arith.constant 0 : i32
    return %c0_i32, %c0_i32_0 : i32, i32
  }
  func.func @transform_6(%arg0: i32, %arg1: i32) -> (i32, i32) {
    %c0_i32 = arith.constant 0 : i32
    %c0_i32_0 = arith.constant 0 : i32
    %c0_i32_1 = arith.constant 0 : i32
    return %c0_i32, %c0_i32_0 : i32, i32
  }
  func.func @transform_7(%arg0: i32, %arg1: i32) -> (i32, i32) {
    %c0_i32 = arith.constant 0 : i32
    %c0_i32_0 = arith.constant 0 : i32
    %c0_i32_1 = arith.constant 0 : i32
    return %c0_i32, %c0_i32_0 : i32, i32
  }
  func.func @transform_8(%arg0: i32, %arg1: i32) -> (i32, i32) {
    %c0_i32 = arith.constant 0 : i32
    %c0_i32_0 = arith.constant 0 : i32
    %c0_i32_1 = arith.constant 0 : i32
    return %c0_i32, %c0_i32_0 : i32, i32
  }
  func.func @transform_9(%arg0: i32, %arg1: i32) -> (i32, i32, i32) {
    %c0_i32 = arith.constant 0 : i32
    %c0_i32_0 = arith.constant 0 : i32
    %c0_i32_1 = arith.constant 0 : i32
    %c0_i32_2 = arith.constant 0 : i32
    return %c0_i32, %c0_i32_0, %c0_i32_1 : i32, i32, i32
  }
  func.func @transform_10(%arg0: i32, %arg1: i32) -> (i32, i32, i32) {
    %c0_i32 = arith.constant 0 : i32
    %c0_i32_0 = arith.constant 0 : i32
    %c0_i32_1 = arith.constant 0 : i32
    %c0_i32_2 = arith.constant 0 : i32
    return %c0_i32, %c0_i32_0, %c0_i32_1 : i32, i32, i32
  }
  func.func @transform_11(%arg0: i32, %arg1: i32) -> (i32, i32, i32) {
    %c0_i32 = arith.constant 0 : i32
    %c0_i32_0 = arith.constant 0 : i32
    %c0_i32_1 = arith.constant 0 : i32
    %c0_i32_2 = arith.constant 0 : i32
    return %c0_i32, %c0_i32_0, %c0_i32_1 : i32, i32, i32
  }
  func.func @transform_12(%arg0: i32, %arg1: i32) -> (i32, i32, i32) {
    %c0_i32 = arith.constant 0 : i32
    %c0_i32_0 = arith.constant 0 : i32
    %c0_i32_1 = arith.constant 0 : i32
    %c0_i32_2 = arith.constant 0 : i32
    return %c0_i32, %c0_i32_0, %c0_i32_1 : i32, i32, i32
  }
  func.func @transform_13(%arg0: i32, %arg1: i32) -> (i32, i32, i32) {
    %c0_i32 = arith.constant 0 : i32
    %c0_i32_0 = arith.constant 0 : i32
    %c0_i32_1 = arith.constant 0 : i32
    %c0_i32_2 = arith.constant 0 : i32
    return %c0_i32, %c0_i32_0, %c0_i32_1 : i32, i32, i32
  }
  func.func @transform_14(%arg0: i32, %arg1: i32) -> (i32, i32, i32) {
    %c0_i32 = arith.constant 0 : i32
    %c0_i32_0 = arith.constant 0 : i32
    %c0_i32_1 = arith.constant 0 : i32
    %c0_i32_2 = arith.constant 0 : i32
    return %c0_i32, %c0_i32_0, %c0_i32_1 : i32, i32, i32
  }
  func.func @transform_15(%arg0: i32, %arg1: i32) -> (i32, i32, i32) {
    %c0_i32 = arith.constant 0 : i32
    %c0_i32_0 = arith.constant 0 : i32
    %c0_i32_1 = arith.constant 0 : i32
    %c0_i32_2 = arith.constant 0 : i32
    return %c0_i32, %c0_i32_0, %c0_i32_1 : i32, i32, i32
  }
  func.func @transform_16(%arg0: i32, %arg1: i32) -> (i32, i32, i32) {
    %c0_i32 = arith.constant 0 : i32
    %c0_i32_0 = arith.constant 0 : i32
    %c0_i32_1 = arith.constant 0 : i32
    %c0_i32_2 = arith.constant 0 : i32
    return %c0_i32, %c0_i32_0, %c0_i32_1 : i32, i32, i32
  }
  func.func @transform_17(%arg0: i32, %arg1: i32) -> (i32, i32) {
    %c0_i32 = arith.constant 0 : i32
    %c0_i32_0 = arith.constant 0 : i32
    return %arg0, %c0_i32 : i32, i32
  }
}

</mosaic_0001>

<llo_original>
// kernel: swin_transformer_forward.1
$region0: #{swin_transformer_forward.1}
  #allocation0 [shape = 'u32[]', space=smem, size = 0x4, offset = 0x4, fixed_abs, tag = 'smem constant byte address 0x4 - core index']
  #allocation1 [shape = 'u32[144,128]{1,0:T(1,128)}', space=vmem, size = 0x12000, scoped, tag = 'internal scratch']
  %s0 = inlined_call_operand.vmem [shape: f32[16,2,8,32], index: 0, kind: input, shape index: {}]
  %s1 = inlined_call_operand.vmem [shape: f32[1,32], index: 1, kind: input, shape index: {}]
  %s2 = inlined_call_operand.vmem [shape: f32[1,32], index: 2, kind: input, shape index: {}]
  %s3 = inlined_call_operand.vmem [shape: f32[1,32], index: 3, kind: input, shape index: {}]
  %s4 = inlined_call_operand.vmem [shape: f32[1,32], index: 4, kind: input, shape index: {}]
  %s5 = inlined_call_operand.vmem [shape: bf16[32,32], index: 5, kind: input, shape index: {}]
  %s6 = inlined_call_operand.vmem [shape: bf16[32,32], index: 6, kind: input, shape index: {}]
  %s7 = inlined_call_operand.vmem [shape: f32[1,32], index: 7, kind: input, shape index: {}]
  %s8 = inlined_call_operand.vmem [shape: f32[128,128], index: 8, kind: input, shape index: {}]
  %s9 = inlined_call_operand.vmem [shape: f32[2,1,128], index: 9, kind: input, shape index: {}]
  %s10 = inlined_call_operand.vmem [shape: f32[2,1,128], index: 10, kind: input, shape index: {}]
  %s11 = inlined_call_operand.vmem [shape: f32[2,1,128], index: 11, kind: input, shape index: {}]
  %s12 = inlined_call_operand.vmem [shape: f32[2,1,128], index: 12, kind: input, shape index: {}]
  %s13 = inlined_call_operand.vmem [shape: bf16[2,128,512], index: 13, kind: input, shape index: {}]
  %s14 = inlined_call_operand.vmem [shape: f32[2,1,512], index: 14, kind: input, shape index: {}]
  %s15 = inlined_call_operand.vmem [shape: bf16[2,512,128], index: 15, kind: input, shape index: {}]
  %s16 = inlined_call_operand.vmem [shape: f32[2,1,128], index: 16, kind: input, shape index: {}]
  %s17 = inlined_call_operand.vmem [shape: f32[32,128], index: 17, kind: output, shape index: {}]
  %s18 = sld [smem:[#allocation0]]
  $region105: #{swin_transformer_forward.1} parent=0
    _
  %s20 = ssub.s32 1, %s18
  %s21 = scalar_select 0, %s20, %s18
  loop: start=0, step=1, limit=6
  $region2: #{swin_transformer_forward.1} parent=0 // loop_pre_header
    _
  $region3: #{swin_transformer_forward.1} parent=0 // loop_header
    %s23 = sphi 0, %s27
    %p24 = scmp.ge.s32.totalorder %s23, 6
    %s30 = sphi 0, %s42
    %s31 = sphi 0, %s38
    %s32 = sphi 0, %s30
    %s33 = sphi 0, %s31
    %s34 = sphi 0, %s32
    %s35 = sphi 0, %s33
    %s45 = sphi 0, %s47
    %s48 = sphi 0, %s45
    %s49 = sphi 0, %s48
    %s65 = sphi 0, %s49
    %s69 = sphi 0, %s69
    %s71 = sphi 0, %s69
    %s72 = sphi 0, %s71
    %s86 = sphi 0, %s72
    %s90 = sphi 0, %s90
    %s92 = sphi 0, %s90
    %s93 = sphi 0, %s92
    %s107 = sphi 0, %s93
    %s111 = sphi 0, %s111
    %s113 = sphi 0, %s111
    %s114 = sphi 0, %s113
    %s128 = sphi 0, %s114
    %s132 = sphi 0, %s132
    %s134 = sphi 0, %s132
    %s135 = sphi 0, %s134
    %s149 = sphi 0, %s135
    %s153 = sphi 0, %s153
    %s155 = sphi 0, %s153
    %s156 = sphi 0, %s155
    %s170 = sphi 0, %s156
    %s174 = sphi 0, %s174
    %s176 = sphi 0, %s174
    %s177 = sphi 0, %s176
    %s191 = sphi 0, %s177
    %s195 = sphi 0, %s195
    %s197 = sphi 0, %s195
    %s198 = sphi 0, %s197
    %s212 = sphi 0, %s198
    %s216 = sphi 0, %s216
    %s218 = sphi 0, %s216
    %s219 = sphi 0, %s218
    %s233 = sphi 0, %s219
    %s237 = sphi 0, %s237
    %s239 = sphi 0, %s237
    %s240 = sphi 0, %s239
    %s254 = sphi 0, %s240
    %s258 = sphi 0, %s258
    %s260 = sphi 0, %s258
    %s261 = sphi 0, %s260
    %s275 = sphi 0, %s261
    %s279 = sphi 0, %s279
    %s281 = sphi 0, %s279
    %s282 = sphi 0, %s281
    %s296 = sphi 0, %s282
    %s300 = sphi 0, %s300
    %s302 = sphi 0, %s300
    %s303 = sphi 0, %s302
    %s317 = sphi 0, %s303
    %s321 = sphi 0, %s321
    %s323 = sphi 0, %s321
    %s324 = sphi 0, %s323
    %s338 = sphi 0, %s324
    %s342 = sphi 0, %s342
    %s344 = sphi 0, %s342
    %s345 = sphi 0, %s344
    %s359 = sphi 0, %s345
    %s363 = sphi 0, %s363
    %s365 = sphi 0, %s363
    %s366 = sphi 0, %s365
    %s380 = sphi 0, %s366
    %s384 = sphi 0, %s384
    %s386 = sphi 0, %s384
    %s387 = sphi 0, %s386
    %s401 = sphi 0, %s387
    %s407 = sphi 0, %s409
    %s410 = sphi 0, %s407
    %s411 = sphi 0, %s410
    %s427 = sphi 0, %s411
  $region4: #{swin_transformer_forward.1} parent=0 // loop_header_branch
    %26 = sbr.rel (%p24) target = $region8
  $region5: #{swin_transformer_forward.1} parent=0 // loop_body
    %s28 = ssub.s32 %s23, 1
    %s29 = ssub.s32 %s23, 2
    %s36 = sadd.s32 1, %s31
    %p37 = scmp.ge.s32.totalorder %s36, 2
    %s38 = scalar_select %p37, 0, %s36
    %s39 = sadd.s32 1, %s30
    %s40 = scalar_select %p37, %s39, %s30
    %p41 = scmp.ge.s32.totalorder %s40, 2
    %s42 = scalar_select %p41, 0, %s40
    %s43 = ssub.s32 %s30, %s42
    %p44 = scmp.eq.s32.totalorder %s43, 0
    %s46 = sadd.s32 %s45, 1
    %s47 = scalar_select %p44, %s45, %s46
    %p50 = pneg %p44
    %p51 = scmp.eq.s32.totalorder %s23, 3
    %p52 = por %p50, %p51
    %p53 = scmp.ne.s32.totalorder %s45, %s48
    %p54 = scmp.eq.s32.totalorder %s23, 0
    %p55 = por %p53, %p54
    %p56 = scmp.ne.s32.totalorder %s45, %s48
    %p57 = scmp.eq.s32.totalorder %s28, 3
    %p58 = por %p56, %p57
    %p59 = scmp.ne.s32.totalorder %s48, %s49
    %p60 = scmp.eq.s32.totalorder %s28, 0
    %p61 = por %p59, %p60
    %p62 = scmp.ne.s32.totalorder %s48, %s49
    %p63 = scmp.eq.s32.totalorder %s29, 3
    %p64 = por %p62, %p63
    %p66 = scmp.ne.s32.totalorder %s49, %s65
    %p67 = scmp.eq.s32.totalorder %s29, 0
    %p68 = por %p66, %p67
    %s70 = sadd.s32 %s69, 1
    %p73 = scmp.eq.s32.totalorder %s23, 3
    %p74 = scmp.ne.s32.totalorder %s69, %s71
    %p75 = scmp.eq.s32.totalorder %s23, 0
    %p76 = por %p74, %p75
    %p77 = scmp.ne.s32.totalorder %s69, %s71
    %p78 = scmp.eq.s32.totalorder %s28, 3
    %p79 = por %p77, %p78
    %p80 = scmp.ne.s32.totalorder %s71, %s72
    %p81 = scmp.eq.s32.totalorder %s28, 0
    %p82 = por %p80, %p81
    %p83 = scmp.ne.s32.totalorder %s71, %s72
    %p84 = scmp.eq.s32.totalorder %s29, 3
    %p85 = por %p83, %p84
    %p87 = scmp.ne.s32.totalorder %s72, %s86
    %p88 = scmp.eq.s32.totalorder %s29, 0
    %p89 = por %p87, %p88
    %s91 = sadd.s32 %s90, 1
    %p94 = scmp.eq.s32.totalorder %s23, 3
    %p95 = scmp.ne.s32.totalorder %s90, %s92
    %p96 = scmp.eq.s32.totalorder %s23, 0
    %p97 = por %p95, %p96
    %p98 = scmp.ne.s32.totalorder %s90, %s92
    %p99 = scmp.eq.s32.totalorder %s28, 3
    %p100 = por %p98, %p99
    %p101 = scmp.ne.s32.totalorder %s92, %s93
    %p102 = scmp.eq.s32.totalorder %s28, 0
    %p103 = por %p101, %p102
    %p104 = scmp.ne.s32.totalorder %s92, %s93
    %p105 = scmp.eq.s32.totalorder %s29, 3
    %p106 = por %p104, %p105
    %p108 = scmp.ne.s32.totalorder %s93, %s107
    %p109 = scmp.eq.s32.totalorder %s29, 0
    %p110 = por %p108, %p109
    %s112 = sadd.s32 %s111, 1
    %p115 = scmp.eq.s32.totalorder %s23, 3
    %p116 = scmp.ne.s32.totalorder %s111, %s113
    %p117 = scmp.eq.s32.totalorder %s23, 0
    %p118 = por %p116, %p117
    %p119 = scmp.ne.s32.totalorder %s111, %s113
    %p120 = scmp.eq.s32.totalorder %s28, 3
    %p121 = por %p119, %p120
    %p122 = scmp.ne.s32.totalorder %s113, %s114
    %p123 = scmp.eq.s32.totalorder %s28, 0
    %p124 = por %p122, %p123
    %p125 = scmp.ne.s32.totalorder %s113, %s114
    %p126 = scmp.eq.s32.totalorder %s29, 3
    %p127 = por %p125, %p126
    %p129 = scmp.ne.s32.totalorder %s114, %s128
    %p130 = scmp.eq.s32.totalorder %s29, 0
    %p131 = por %p129, %p130
    %s133 = sadd.s32 %s132, 1
    %p136 = scmp.eq.s32.totalorder %s23, 3
    %p137 = scmp.ne.s32.totalorder %s132, %s134
    %p138 = scmp.eq.s32.totalorder %s23, 0
    %p139 = por %p137, %p138
    %p140 = scmp.ne.s32.totalorder %s132, %s134
    %p141 = scmp.eq.s32.totalorder %s28, 3
    %p142 = por %p140, %p141
    %p143 = scmp.ne.s32.totalorder %s134, %s135
    %p144 = scmp.eq.s32.totalorder %s28, 0
    %p145 = por %p143, %p144
    %p146 = scmp.ne.s32.totalorder %s134, %s135
    %p147 = scmp.eq.s32.totalorder %s29, 3
    %p148 = por %p146, %p147
    %p150 = scmp.ne.s32.totalorder %s135, %s149
    %p151 = scmp.eq.s32.totalorder %s29, 0
    %p152 = por %p150, %p151
    %s154 = sadd.s32 %s153, 1
    %p157 = scmp.eq.s32.totalorder %s23, 3
    %p158 = scmp.ne.s32.totalorder %s153, %s155
    %p159 = scmp.eq.s32.totalorder %s23, 0
    %p160 = por %p158, %p159
    %p161 = scmp.ne.s32.totalorder %s153, %s155
    %p162 = scmp.eq.s32.totalorder %s28, 3
    %p163 = por %p161, %p162
    %p164 = scmp.ne.s32.totalorder %s155, %s156
    %p165 = scmp.eq.s32.totalorder %s28, 0
    %p166 = por %p164, %p165
    %p167 = scmp.ne.s32.totalorder %s155, %s156
    %p168 = scmp.eq.s32.totalorder %s29, 3
    %p169 = por %p167, %p168
    %p171 = scmp.ne.s32.totalorder %s156, %s170
    %p172 = scmp.eq.s32.totalorder %s29, 0
    %p173 = por %p171, %p172
    %s175 = sadd.s32 %s174, 1
    %p178 = scmp.eq.s32.totalorder %s23, 3
    %p179 = scmp.ne.s32.totalorder %s174, %s176
    %p180 = scmp.eq.s32.totalorder %s23, 0
    %p181 = por %p179, %p180
    %p182 = scmp.ne.s32.totalorder %s174, %s176
    %p183 = scmp.eq.s32.totalorder %s28, 3
    %p184 = por %p182, %p183
    %p185 = scmp.ne.s32.totalorder %s176, %s177
    %p186 = scmp.eq.s32.totalorder %s28, 0
    %p187 = por %p185, %p186
    %p188 = scmp.ne.s32.totalorder %s176, %s177
    %p189 = scmp.eq.s32.totalorder %s29, 3
    %p190 = por %p188, %p189
    %p192 = scmp.ne.s32.totalorder %s177, %s191
    %p193 = scmp.eq.s32.totalorder %s29, 0
    %p194 = por %p192, %p193
    %s196 = sadd.s32 %s195, 1
    %p199 = scmp.eq.s32.totalorder %s23, 3
    %p200 = scmp.ne.s32.totalorder %s195, %s197
    %p201 = scmp.eq.s32.totalorder %s23, 0
    %p202 = por %p200, %p201
    %p203 = scmp.ne.s32.totalorder %s195, %s197
    %p204 = scmp.eq.s32.totalorder %s28, 3
    %p205 = por %p203, %p204
    %p206 = scmp.ne.s32.totalorder %s197, %s198
    %p207 = scmp.eq.s32.totalorder %s28, 0
    %p208 = por %p206, %p207
    %p209 = scmp.ne.s32.totalorder %s197, %s198
    %p210 = scmp.eq.s32.totalorder %s29, 3
    %p211 = por %p209, %p210
    %p213 = scmp.ne.s32.totalorder %s198, %s212
    %p214 = scmp.eq.s32.totalorder %s29, 0
    %p215 = por %p213, %p214
    %s217 = sadd.s32 %s216, 1
    %p220 = scmp.eq.s32.totalorder %s23, 3
    %p221 = scmp.ne.s32.totalorder %s216, %s218
    %p222 = scmp.eq.s32.totalorder %s23, 0
    %p223 = por %p221, %p222
    %p224 = scmp.ne.s32.totalorder %s216, %s218
    %p225 = scmp.eq.s32.totalorder %s28, 3
    %p226 = por %p224, %p225
    %p227 = scmp.ne.s32.totalorder %s218, %s219
    %p228 = scmp.eq.s32.totalorder %s28, 0
    %p229 = por %p227, %p228
    %p230 = scmp.ne.s32.totalorder %s218, %s219
    %p231 = scmp.eq.s32.totalorder %s29, 3
    %p232 = por %p230, %p231
    %p234 = scmp.ne.s32.totalorder %s219, %s233
    %p235 = scmp.eq.s32.totalorder %s29, 0
    %p236 = por %p234, %p235
    %s238 = sadd.s32 %s237, 1
    %p241 = scmp.eq.s32.totalorder %s23, 3
    %p242 = scmp.ne.s32.totalorder %s237, %s239
    %p243 = scmp.eq.s32.totalorder %s23, 0
    %p244 = por %p242, %p243
    %p245 = scmp.ne.s32.totalorder %s237, %s239
    %p246 = scmp.eq.s32.totalorder %s28, 3
    %p247 = por %p245, %p246
    %p248 = scmp.ne.s32.totalorder %s239, %s240
    %p249 = scmp.eq.s32.totalorder %s28, 0
    %p250 = por %p248, %p249
    %p251 = scmp.ne.s32.totalorder %s239, %s240
    %p252 = scmp.eq.s32.totalorder %s29, 3
    %p253 = por %p251, %p252
    %p255 = scmp.ne.s32.totalorder %s240, %s254
    %p256 = scmp.eq.s32.totalorder %s29, 0
    %p257 = por %p255, %p256
    %s259 = sadd.s32 %s258, 1
    %p262 = scmp.eq.s32.totalorder %s23, 3
    %p263 = scmp.ne.s32.totalorder %s258, %s260
    %p264 = scmp.eq.s32.totalorder %s23, 0
    %p265 = por %p263, %p264
    %p266 = scmp.ne.s32.totalorder %s258, %s260
    %p267 = scmp.eq.s32.totalorder %s28, 3
    %p268 = por %p266, %p267
    %p269 = scmp.ne.s32.totalorder %s260, %s261
    %p270 = scmp.eq.s32.totalorder %s28, 0
    %p271 = por %p269, %p270
    %p272 = scmp.ne.s32.totalorder %s260, %s261
    %p273 = scmp.eq.s32.totalorder %s29, 3
    %p274 = por %p272, %p273
    %p276 = scmp.ne.s32.totalorder %s261, %s275
    %p277 = scmp.eq.s32.totalorder %s29, 0
    %p278 = por %p276, %p277
    %s280 = sadd.s32 %s279, 1
    %p283 = scmp.eq.s32.totalorder %s23, 3
    %p284 = scmp.ne.s32.totalorder %s279, %s281
    %p285 = scmp.eq.s32.totalorder %s23, 0
    %p286 = por %p284, %p285
    %p287 = scmp.ne.s32.totalorder %s279, %s281
    %p288 = scmp.eq.s32.totalorder %s28, 3
    %p289 = por %p287, %p288
    %p290 = scmp.ne.s32.totalorder %s281, %s282
    %p291 = scmp.eq.s32.totalorder %s28, 0
    %p292 = por %p290, %p291
    %p293 = scmp.ne.s32.totalorder %s281, %s282
    %p294 = scmp.eq.s32.totalorder %s29, 3
    %p295 = por %p293, %p294
    %p297 = scmp.ne.s32.totalorder %s282, %s296
    %p298 = scmp.eq.s32.totalorder %s29, 0
    %p299 = por %p297, %p298
    %s301 = sadd.s32 %s300, 1
    %p304 = scmp.eq.s32.totalorder %s23, 3
    %p305 = scmp.ne.s32.totalorder %s300, %s302
    %p306 = scmp.eq.s32.totalorder %s23, 0
    %p307 = por %p305, %p306
    %p308 = scmp.ne.s32.totalorder %s300, %s302
    %p309 = scmp.eq.s32.totalorder %s28, 3
    %p310 = por %p308, %p309
    %p311 = scmp.ne.s32.totalorder %s302, %s303
    %p312 = scmp.eq.s32.totalorder %s28, 0
    %p313 = por %p311, %p312
    %p314 = scmp.ne.s32.totalorder %s302, %s303
    %p315 = scmp.eq.s32.totalorder %s29, 3
    %p316 = por %p314, %p315
    %p318 = scmp.ne.s32.totalorder %s303, %s317
    %p319 = scmp.eq.s32.totalorder %s29, 0
    %p320 = por %p318, %p319
    %s322 = sadd.s32 %s321, 1
    %p325 = scmp.eq.s32.totalorder %s23, 3
    %p326 = scmp.ne.s32.totalorder %s321, %s323
    %p327 = scmp.eq.s32.totalorder %s23, 0
    %p328 = por %p326, %p327
    %p329 = scmp.ne.s32.totalorder %s321, %s323
    %p330 = scmp.eq.s32.totalorder %s28, 3
    %p331 = por %p329, %p330
    %p332 = scmp.ne.s32.totalorder %s323, %s324
    %p333 = scmp.eq.s32.totalorder %s28, 0
    %p334 = por %p332, %p333
    %p335 = scmp.ne.s32.totalorder %s323, %s324
    %p336 = scmp.eq.s32.totalorder %s29, 3
    %p337 = por %p335, %p336
    %p339 = scmp.ne.s32.totalorder %s324, %s338
    %p340 = scmp.eq.s32.totalorder %s29, 0
    %p341 = por %p339, %p340
    %s343 = sadd.s32 %s342, 1
    %p346 = scmp.eq.s32.totalorder %s23, 3
    %p347 = scmp.ne.s32.totalorder %s342, %s344
    %p348 = scmp.eq.s32.totalorder %s23, 0
    %p349 = por %p347, %p348
    %p350 = scmp.ne.s32.totalorder %s342, %s344
    %p351 = scmp.eq.s32.totalorder %s28, 3
    %p352 = por %p350, %p351
    %p353 = scmp.ne.s32.totalorder %s344, %s345
    %p354 = scmp.eq.s32.totalorder %s28, 0
    %p355 = por %p353, %p354
    %p356 = scmp.ne.s32.totalorder %s344, %s345
    %p357 = scmp.eq.s32.totalorder %s29, 3
    %p358 = por %p356, %p357
    %p360 = scmp.ne.s32.totalorder %s345, %s359
    %p361 = scmp.eq.s32.totalorder %s29, 0
    %p362 = por %p360, %p361
    %s364 = sadd.s32 %s363, 1
    %p367 = scmp.eq.s32.totalorder %s23, 3
    %p368 = scmp.ne.s32.totalorder %s363, %s365
    %p369 = scmp.eq.s32.totalorder %s23, 0
    %p370 = por %p368, %p369
    %p371 = scmp.ne.s32.totalorder %s363, %s365
    %p372 = scmp.eq.s32.totalorder %s28, 3
    %p373 = por %p371, %p372
    %p374 = scmp.ne.s32.totalorder %s365, %s366
    %p375 = scmp.eq.s32.totalorder %s28, 0
    %p376 = por %p374, %p375
    %p377 = scmp.ne.s32.totalorder %s365, %s366
    %p378 = scmp.eq.s32.totalorder %s29, 3
    %p379 = por %p377, %p378
    %p381 = scmp.ne.s32.totalorder %s366, %s380
    %p382 = scmp.eq.s32.totalorder %s29, 0
    %p383 = por %p381, %p382
    %s385 = sadd.s32 %s384, 1
    %p388 = scmp.eq.s32.totalorder %s23, 3
    %p389 = scmp.ne.s32.totalorder %s384, %s386
    %p390 = scmp.eq.s32.totalorder %s23, 0
    %p391 = por %p389, %p390
    %p392 = scmp.ne.s32.totalorder %s384, %s386
    %p393 = scmp.eq.s32.totalorder %s28, 3
    %p394 = por %p392, %p393
    %p395 = scmp.ne.s32.totalorder %s386, %s387
    %p396 = scmp.eq.s32.totalorder %s28, 0
    %p397 = por %p395, %p396
    %p398 = scmp.ne.s32.totalorder %s386, %s387
    %p399 = scmp.eq.s32.totalorder %s29, 3
    %p400 = por %p398, %p399
    %p402 = scmp.ne.s32.totalorder %s387, %s401
    %p403 = scmp.eq.s32.totalorder %s29, 0
    %p404 = por %p402, %p403
    %s405 = ssub.s32 %s30, %s42
    %p406 = scmp.eq.s32.totalorder %s405, 0
    %s408 = sadd.s32 %s407, 1
    %s409 = scalar_select %p406, %s407, %s408
    %p412 = pneg %p406
    %p413 = scmp.eq.s32.totalorder %s23, 3
    %p414 = por %p412, %p413
    %p415 = scmp.ne.s32.totalorder %s407, %s410
    %p416 = scmp.eq.s32.totalorder %s23, 0
    %p417 = por %p415, %p416
    %p418 = scmp.ne.s32.totalorder %s407, %s410
    %p419 = scmp.eq.s32.totalorder %s28, 3
    %p420 = por %p418, %p419
    %p421 = scmp.ne.s32.totalorder %s410, %s411
    %p422 = scmp.eq.s32.totalorder %s28, 0
    %p423 = por %p421, %p422
    %p424 = scmp.ne.s32.totalorder %s410, %s411
    %p425 = scmp.eq.s32.totalorder %s29, 3
    %p426 = por %p424, %p425
    %p428 = scmp.ne.s32.totalorder %s411, %s427
    %p429 = scmp.eq.s32.totalorder %s29, 0
    %p430 = por %p428, %p429
    %p431 = scmp.le.s32.totalorder 1, %s23
    %p432 = scmp.lt.s32.totalorder %s23, 5
    %p433 = pnand %p431, %p432
    %p434 = pneg %p433
    // Predicated region
    $region9: #{swin_transformer_forward.1} parent=5 // pred_check
      _
    $region10: #{swin_transformer_forward.1} parent=5 // pred_check_branch
      %436 = sbr.rel (%p433) target = $region12
    $region11: #{swin_transformer_forward.1} parent=5 // pred_region
      %s437 = ssub.s32 %s23, 1
      // Predicated region
      $region13: #{swin_transformer_forward.1} parent=11 // pred_check
        %p438 = pneg %p82
      $region14: #{swin_transformer_forward.1} parent=11 // pred_check_branch
        %440 = sbr.rel (%p438) target = $region16
      $region15: #{swin_transformer_forward.1} parent=11 // pred_region
        _
      $region16: #{swin_transformer_forward.1} parent=11 // pred_fallthru
        _
      // Predicated region
      $region17: #{swin_transformer_forward.1} parent=11 // pred_check
        %p441 = pneg %p103
      $region18: #{swin_transformer_forward.1} parent=11 // pred_check_branch
        %443 = sbr.rel (%p441) target = $region20
      $region19: #{swin_transformer_forward.1} parent=11 // pred_region
        _
      $region20: #{swin_transformer_forward.1} parent=11 // pred_fallthru
        _
      // Predicated region
      $region21: #{swin_transformer_forward.1} parent=11 // pred_check
        %p444 = pneg %p124
      $region22: #{swin_transformer_forward.1} parent=11 // pred_check_branch
        %446 = sbr.rel (%p444) target = $region24
      $region23: #{swin_transformer_forward.1} parent=11 // pred_region
        _
      $region24: #{swin_transformer_forward.1} parent=11 // pred_fallthru
        _
      // Predicated region
      $region25: #{swin_transformer_forward.1} parent=11 // pred_check
        %p447 = pneg %p145
      $region26: #{swin_transformer_forward.1} parent=11 // pred_check_branch
        %449 = sbr.rel (%p447) target = $region28
      $region27: #{swin_transformer_forward.1} parent=11 // pred_region
        _
      $region28: #{swin_transformer_forward.1} parent=11 // pred_fallthru
        _
      // Predicated region
      $region29: #{swin_transformer_forward.1} parent=11 // pred_check
        %p450 = pneg %p166
      $region30: #{swin_transformer_forward.1} parent=11 // pred_check_branch
        %452 = sbr.rel (%p450) target = $region32
      $region31: #{swin_transformer_forward.1} parent=11 // pred_region
        _
      $region32: #{swin_transformer_forward.1} parent=11 // pred_fallthru
        _
      // Predicated region
      $region33: #{swin_transformer_forward.1} parent=11 // pred_check
        %p453 = pneg %p187
      $region34: #{swin_transformer_forward.1} parent=11 // pred_check_branch
        %455 = sbr.rel (%p453) target = $region36
      $region35: #{swin_transformer_forward.1} parent=11 // pred_region
        _
      $region36: #{swin_transformer_forward.1} parent=11 // pred_fallthru
        _
      // Predicated region
      $region37: #{swin_transformer_forward.1} parent=11 // pred_check
        %p456 = pneg %p208
      $region38: #{swin_transformer_forward.1} parent=11 // pred_check_branch
        %458 = sbr.rel (%p456) target = $region40
      $region39: #{swin_transformer_forward.1} parent=11 // pred_region
        _
      $region40: #{swin_transformer_forward.1} parent=11 // pred_fallthru
        _
      // Predicated region
      $region41: #{swin_transformer_forward.1} parent=11 // pred_check
        %p459 = pneg %p229
      $region42: #{swin_transformer_forward.1} parent=11 // pred_check_branch
        %461 = sbr.rel (%p459) target = $region44
      $region43: #{swin_transformer_forward.1} parent=11 // pred_region
        _
      $region44: #{swin_transformer_forward.1} parent=11 // pred_fallthru
        _
      // Predicated region
      $region45: #{swin_transformer_forward.1} parent=11 // pred_check
        %p462 = pneg %p250
      $region46: #{swin_transformer_forward.1} parent=11 // pred_check_branch
        %464 = sbr.rel (%p462) target = $region48
      $region47: #{swin_transformer_forward.1} parent=11 // pred_region
        _
      $region48: #{swin_transformer_forward.1} parent=11 // pred_fallthru
        _
      // Predicated region
      $region49: #{swin_transformer_forward.1} parent=11 // pred_check
        %p465 = pneg %p271
      $region50: #{swin_transformer_forward.1} parent=11 // pred_check_branch
        %467 = sbr.rel (%p465) target = $region52
      $region51: #{swin_transformer_forward.1} parent=11 // pred_region
        _
      $region52: #{swin_transformer_forward.1} parent=11 // pred_fallthru
        _
      // Predicated region
      $region53: #{swin_transformer_forward.1} parent=11 // pred_check
        %p468 = pneg %p292
      $region54: #{swin_transformer_forward.1} parent=11 // pred_check_branch
        %470 = sbr.rel (%p468) target = $region56
      $region55: #{swin_transformer_forward.1} parent=11 // pred_region
        _
      $region56: #{swin_transformer_forward.1} parent=11 // pred_fallthru
        _
      // Predicated region
      $region57: #{swin_transformer_forward.1} parent=11 // pred_check
        %p471 = pneg %p313
      $region58: #{swin_transformer_forward.1} parent=11 // pred_check_branch
        %473 = sbr.rel (%p471) target = $region60
      $region59: #{swin_transformer_forward.1} parent=11 // pred_region
        _
      $region60: #{swin_transformer_forward.1} parent=11 // pred_fallthru
        _
      // Predicated region
      $region61: #{swin_transformer_forward.1} parent=11 // pred_check
        %p474 = pneg %p334
      $region62: #{swin_transformer_forward.1} parent=11 // pred_check_branch
        %476 = sbr.rel (%p474) target = $region64
      $region63: #{swin_transformer_forward.1} parent=11 // pred_region
        _
      $region64: #{swin_transformer_forward.1} parent=11 // pred_fallthru
        _
      // Predicated region
      $region65: #{swin_transformer_forward.1} parent=11 // pred_check
        %p477 = pneg %p355
      $region66: #{swin_transformer_forward.1} parent=11 // pred_check_branch
        %479 = sbr.rel (%p477) target = $region68
      $region67: #{swin_transformer_forward.1} parent=11 // pred_region
        _
      $region68: #{swin_transformer_forward.1} parent=11 // pred_fallthru
        _
      // Predicated region
      $region69: #{swin_transformer_forward.1} parent=11 // pred_check
        %p480 = pneg %p376
      $region70: #{swin_transformer_forward.1} parent=11 // pred_check_branch
        %482 = sbr.rel (%p480) target = $region72
      $region71: #{swin_transformer_forward.1} parent=11 // pred_region
        _
      $region72: #{swin_transformer_forward.1} parent=11 // pred_fallthru
        _
      // Predicated region
      $region73: #{swin_transformer_forward.1} parent=11 // pred_check
        %p483 = pneg %p397
      $region74: #{swin_transformer_forward.1} parent=11 // pred_check_branch
        %485 = sbr.rel (%p483) target = $region76
      $region75: #{swin_transformer_forward.1} parent=11 // pred_region
        _
      $region76: #{swin_transformer_forward.1} parent=11 // pred_fallthru
        _
    $region12: #{swin_transformer_forward.1} parent=5 // pred_fallthru
      _
    %p486 = scmp.lt.s32.totalorder %s23, 4
    // Predicated region
    $region77: #{swin_transformer_forward.1} parent=5 // pred_check
      %p487 = pneg %p486
    $region78: #{swin_transformer_forward.1} parent=5 // pred_check_branch
      %489 = sbr.rel (%p487) target = $region80
    $region79: #{swin_transformer_forward.1} parent=5 // pred_region
      // Predicated region
      $region81: #{swin_transformer_forward.1} parent=79 // pred_check
        %p490 = pneg %p55
      $region82: #{swin_transformer_forward.1} parent=79 // pred_check_branch
        %492 = sbr.rel (%p490) target = $region84
      $region83: #{swin_transformer_forward.1} parent=79 // pred_region
        %s493 = smul.u32 8, %s30
        %p494 = scmp.lt.s32.totalorder %s493, 15
        %s495 = scalar_select %p494, %s493, 15
        %s496 = smul.addr %s495, 2
        %s497 = smul.addr %s496, 8
        %s498 = scalar_lea.vmem %s0, %s497
        %s499 = smul.u32 8, %s30
      $region84: #{swin_transformer_forward.1} parent=79 // pred_fallthru
        _
    $region80: #{swin_transformer_forward.1} parent=5 // pred_fallthru
      _
    %p500 = scmp.le.s32.totalorder 1, %s23
    %p501 = scmp.lt.s32.totalorder %s23, 5
    %p502 = pnand %p500, %p501
    %p503 = pneg %p502
    // Predicated region
    $region85: #{swin_transformer_forward.1} parent=5 // pred_check
      _
    $region86: #{swin_transformer_forward.1} parent=5 // pred_check_branch
      %505 = sbr.rel (%p502) target = $region88
    $region87: #{swin_transformer_forward.1} parent=5 // pred_region
      %s506 = ssub.s32 %s23, 1
      %s507 = smul.u32 8, %s32
      %p508 = scmp.lt.s32.totalorder %s507, 15
      %s509 = scalar_select %p508, %s507, 15
      %s510 = smul.addr %s509, 2
      %s511 = smul.addr %s510, 8
      %s512 = scalar_lea.vmem %s0, %s511
      %p513 = pneg %p61
      %p514 = pneg %p58
      %p515 = pneg %p82
      %p516 = pneg %p79
      %p517 = pneg %p103
      %p518 = pneg %p100
      %p519 = pneg %p124
      %p520 = pneg %p121
      %p521 = pneg %p145
      %p522 = pneg %p142
      %p523 = pneg %p166
      %p524 = pneg %p163
      %p525 = pneg %p187
      %p526 = pneg %p184
      %p527 = pneg %p208
      %p528 = pneg %p205
      %p529 = pneg %p229
      %p530 = pneg %p226
      %p531 = pneg %p250
      %p532 = pneg %p247
      %p533 = pneg %p271
      %p534 = pneg %p268
      %p535 = pneg %p292
      %p536 = pneg %p289
      %p537 = pneg %p313
      %p538 = pneg %p310
      %p539 = pneg %p334
      %p540 = pneg %p331
      %p541 = pneg %p355
      %p542 = pneg %p352
      %p543 = pneg %p376
      %p544 = pneg %p373
      %p545 = pneg %p397
      %p546 = pneg %p394
      %p547 = pneg %p423
      %p548 = pneg %p420
      %s549 = smul.u32 2, %s32
      %p550 = scmp.lt.s32.totalorder %s549, 3
      %s551 = scalar_select %p550, %s549, 3
      %s552 = smul.addr %s551, 8
      %s553 = scalar_lea.vmem %s17, %s552
      %s554 = smul.u32 8, %s32
      %p555 = scmp.lt.s32.totalorder %s554, 15
      %s556 = scalar_select %p555, %s554, 15
      %s557 = smul.addr %s556, 2
      %s558 = smul.addr %s557, 8
      %s559 = scalar_lea.vmem %s0, %s558
      %s560 = smul.u32 8, %s32
      %s561 = smul.u32 2, %s32
      %p562 = scmp.lt.s32.totalorder %s561, 3
      %s563 = scalar_select %p562, %s561, 3
      %s564 = smul.addr %s563, 8
      %s565 = scalar_lea.vmem %s17, %s564
      %s566 = smul.u32 2, %s32
      %p568 = scmp.eq.s32.totalorder %s33, 0
      // Predicated region
      $region89: #{swin_transformer_forward.1} parent=87 // pred_check
        %p569 = pneg %p568
      $region90: #{swin_transformer_forward.1} parent=87 // pred_check_branch
        %571 = sbr.rel (%p569) target = $region92
      $region91: #{swin_transformer_forward.1} parent=87 // pred_region
        %v572 = vld [vmem:[%s559] sm:$0xff]
        %v573 = vld [vmem:[%s559 + $0x8] sm:$0xff]
        %v574 = vld [vmem:[%s559 + $0x10] sm:$0xff]
        %v575 = vld [vmem:[%s559 + $0x18] sm:$0xff]
        %v576 = vld [vmem:[%s559 + $0x20] sm:$0xff]
        %v577 = vld [vmem:[%s559 + $0x28] sm:$0xff]
        %v578 = vld [vmem:[%s559 + $0x30] sm:$0xff]
        %v579 = vld [vmem:[%s559 + $0x38] sm:$0xff]
        %v580 = vld [vmem:[%s559 + $0x40] sm:$0xff]
        %v581 = vld [vmem:[%s559 + $0x48] sm:$0xff]
        %v582 = vld [vmem:[%s559 + $0x50] sm:$0xff]
        %v583 = vld [vmem:[%s559 + $0x58] sm:$0xff]
        %v584 = vld [vmem:[%s559 + $0x60] sm:$0xff]
        %v585 = vld [vmem:[%s559 + $0x68] sm:$0xff]
        %v586 = vld [vmem:[%s559 + $0x70] sm:$0xff]
        %v587 = vld [vmem:[%s559 + $0x78] sm:$0xff]
        %vm588 = vcmask 261120
        %v589 = vsel %vm588, %v572, 0.0
        %590 = vadd.xlane.f32.xlu0 %v589
        %v591 = vpop.xlane.xlu0 %590
        %v592 = vsel %vm588, %v574, 0.0
        %593 = vadd.xlane.f32.xlu0 %v592
        %v594 = vpop.xlane.xlu0 %593
        %v595 = vsel %vm588, %v576, 0.0
        %596 = vadd.xlane.f32.xlu0 %v595
        %v597 = vpop.xlane.xlu0 %596
        %v598 = vsel %vm588, %v578, 0.0
        %599 = vadd.xlane.f32.xlu0 %v598
        %v600 = vpop.xlane.xlu0 %599
        %v601 = vsel %vm588, %v580, 0.0
        %602 = vadd.xlane.f32.xlu0 %v601
        %v603 = vpop.xlane.xlu0 %602
        %v604 = vsel %vm588, %v582, 0.0
        %605 = vadd.xlane.f32.xlu0 %v604
        %v606 = vpop.xlane.xlu0 %605
        %v607 = vsel %vm588, %v584, 0.0
        %608 = vadd.xlane.f32.xlu0 %v607
        %v609 = vpop.xlane.xlu0 %608
        %v610 = vsel %vm588, %v586, 0.0
        %611 = vadd.xlane.f32.xlu0 %v610
        %v612 = vpop.xlane.xlu0 %611
        %v613 = vsel %vm588, %v573, 0.0
        %614 = vadd.xlane.f32.xlu0 %v613
        %v615 = vpop.xlane.xlu0 %614
        %v616 = vsel %vm588, %v575, 0.0
        %617 = vadd.xlane.f32.xlu0 %v616
        %v618 = vpop.xlane.xlu0 %617
        %v619 = vsel %vm588, %v577, 0.0
        %620 = vadd.xlane.f32.xlu0 %v619
        %v621 = vpop.xlane.xlu0 %620
        %v622 = vsel %vm588, %v579, 0.0
        %623 = vadd.xlane.f32.xlu0 %v622
        %v624 = vpop.xlane.xlu0 %623
        %v625 = vsel %vm588, %v581, 0.0
        %626 = vadd.xlane.f32.xlu0 %v625
        %v627 = vpop.xlane.xlu0 %626
        %v628 = vsel %vm588, %v583, 0.0
        %629 = vadd.xlane.f32.xlu0 %v628
        %v630 = vpop.xlane.xlu0 %629
        %v631 = vsel %vm588, %v585, 0.0
        %632 = vadd.xlane.f32.xlu0 %v631
        %v633 = vpop.xlane.xlu0 %632
        %v634 = vsel %vm588, %v587, 0.0
        %635 = vadd.xlane.f32.xlu0 %v634
        %v636 = vpop.xlane.xlu0 %635
        %v637 = vadd.f32 %v591, %v615
        %v638 = vadd.f32 %v594, %v618
        %v639 = vadd.f32 %v597, %v621
        %v640 = vadd.f32 %v600, %v624
        %v641 = vadd.f32 %v603, %v627
        %v642 = vadd.f32 %v606, %v630
        %v643 = vadd.f32 %v609, %v633
        %v644 = vadd.f32 %v612, %v636
        %v645 = vmul.f32 %v637, 0.015625
        %v646 = vmul.f32 %v638, 0.015625
        %v647 = vmul.f32 %v639, 0.015625
        %v648 = vmul.f32 %v640, 0.015625
        %v649 = vmul.f32 %v641, 0.015625
        %v650 = vmul.f32 %v642, 0.015625
        %v651 = vmul.f32 %v643, 0.015625
        %v652 = vmul.f32 %v644, 0.015625
        %v653 = vsub.f32 %v572, %v645
        %v654 = vsub.f32 %v574, %v646
        %v655 = vsub.f32 %v576, %v647
        %v656 = vsub.f32 %v578, %v648
        %v657 = vsub.f32 %v580, %v649
        %v658 = vsub.f32 %v582, %v650
        %v659 = vsub.f32 %v584, %v651
        %v660 = vsub.f32 %v586, %v652
        %v661 = vmul.f32 %v653, %v653
        %v662 = vmul.f32 %v654, %v654
        %v663 = vmul.f32 %v655, %v655
        %v664 = vmul.f32 %v656, %v656
        %v665 = vmul.f32 %v657, %v657
        %v666 = vmul.f32 %v658, %v658
        %v667 = vmul.f32 %v659, %v659
        %v668 = vmul.f32 %v660, %v660
        %v669 = vsel %vm588, %v661, 0.0
        %670 = vadd.xlane.f32.xlu0 %v669
        %v671 = vpop.xlane.xlu0 %670
        %v672 = vsel %vm588, %v662, 0.0
        %673 = vadd.xlane.f32.xlu0 %v672
        %v674 = vpop.xlane.xlu0 %673
        %v675 = vsel %vm588, %v663, 0.0
        %676 = vadd.xlane.f32.xlu0 %v675
        %v677 = vpop.xlane.xlu0 %676
        %v678 = vsel %vm588, %v664, 0.0
        %679 = vadd.xlane.f32.xlu0 %v678
        %v680 = vpop.xlane.xlu0 %679
        %v681 = vsel %vm588, %v665, 0.0
        %682 = vadd.xlane.f32.xlu0 %v681
        %v683 = vpop.xlane.xlu0 %682
        %v684 = vsel %vm588, %v666, 0.0
        %685 = vadd.xlane.f32.xlu0 %v684
        %v686 = vpop.xlane.xlu0 %685
        %v687 = vsel %vm588, %v667, 0.0
        %688 = vadd.xlane.f32.xlu0 %v687
        %v689 = vpop.xlane.xlu0 %688
        %v690 = vsel %vm588, %v668, 0.0
        %691 = vadd.xlane.f32.xlu0 %v690
        %v692 = vpop.xlane.xlu0 %691
        %v693 = vsub.f32 %v573, %v645
        %v694 = vsub.f32 %v575, %v646
        %v695 = vsub.f32 %v577, %v647
        %v696 = vsub.f32 %v579, %v648
        %v697 = vsub.f32 %v581, %v649
        %v698 = vsub.f32 %v583, %v650
        %v699 = vsub.f32 %v585, %v651
        %v700 = vsub.f32 %v587, %v652
        %v701 = vmul.f32 %v693, %v693
        %v702 = vmul.f32 %v694, %v694
        %v703 = vmul.f32 %v695, %v695
        %v704 = vmul.f32 %v696, %v696
        %v705 = vmul.f32 %v697, %v697
        %v706 = vmul.f32 %v698, %v698
        %v707 = vmul.f32 %v699, %v699
        %v708 = vmul.f32 %v700, %v700
        %v709 = vsel %vm588, %v701, 0.0
        %710 = vadd.xlane.f32.xlu0 %v709
        %v711 = vpop.xlane.xlu0 %710
        %v712 = vsel %vm588, %v702, 0.0
        %713 = vadd.xlane.f32.xlu0 %v712
        %v714 = vpop.xlane.xlu0 %713
        %v715 = vsel %vm588, %v703, 0.0
        %716 = vadd.xlane.f32.xlu0 %v715
        %v717 = vpop.xlane.xlu0 %716
        %v718 = vsel %vm588, %v704, 0.0
        %719 = vadd.xlane.f32.xlu0 %v718
        %v720 = vpop.xlane.xlu0 %719
        %v721 = vsel %vm588, %v705, 0.0
        %722 = vadd.xlane.f32.xlu0 %v721
        %v723 = vpop.xlane.xlu0 %722
        %v724 = vsel %vm588, %v706, 0.0
        %725 = vadd.xlane.f32.xlu0 %v724
        %v726 = vpop.xlane.xlu0 %725
        %v727 = vsel %vm588, %v707, 0.0
        %728 = vadd.xlane.f32.xlu0 %v727
        %v729 = vpop.xlane.xlu0 %728
        %v730 = vsel %vm588, %v708, 0.0
        %731 = vadd.xlane.f32.xlu0 %v730
        %v732 = vpop.xlane.xlu0 %731
        %v733 = vadd.f32 %v671, %v711
        %v734 = vadd.f32 %v674, %v714
        %v735 = vadd.f32 %v677, %v717
        %v736 = vadd.f32 %v680, %v720
        %v737 = vadd.f32 %v683, %v723
        %v738 = vadd.f32 %v686, %v726
        %v739 = vadd.f32 %v689, %v729
        %v740 = vadd.f32 %v692, %v732
        %v741 = vmul.f32 %v733, 0.015625
        %v742 = vmul.f32 %v734, 0.015625
        %v743 = vmul.f32 %v735, 0.015625
        %v744 = vmul.f32 %v736, 0.015625
        %v745 = vmul.f32 %v737, 0.015625
        %v746 = vmul.f32 %v738, 0.015625
        %v747 = vmul.f32 %v739, 0.015625
        %v748 = vmul.f32 %v740, 0.015625
        %v749 = vadd.f32 %v741, 1e-05
        %v750 = vadd.f32 %v742, 1e-05
        %v751 = vadd.f32 %v743, 1e-05
        %v752 = vadd.f32 %v744, 1e-05
        %v753 = vadd.f32 %v745, 1e-05
        %v754 = vadd.f32 %v746, 1e-05
        %v755 = vadd.f32 %v747, 1e-05
        %v756 = vadd.f32 %v748, 1e-05
        %v757 = vrsqrt.pop %v749
        %v758 = vrsqrt.pop %v750
        %v759 = vrsqrt.pop %v751
        %v760 = vrsqrt.pop %v752
        %v761 = vrsqrt.pop %v753
        %v762 = vrsqrt.pop %v754
        %v763 = vrsqrt.pop %v755
        %v764 = vrsqrt.pop %v756
        %v765 = vmul.f32 %v653, %v757
        %v766 = vmul.f32 %v654, %v758
        %v767 = vmul.f32 %v655, %v759
        %v768 = vmul.f32 %v656, %v760
        %v769 = vmul.f32 %v657, %v761
        %v770 = vmul.f32 %v658, %v762
        %v771 = vmul.f32 %v659, %v763
        %v772 = vmul.f32 %v660, %v764
        %v773 = vld [vmem:[%s1] sm:$0x1]
        %v775 = vlaneseq
        %v776 = vshrl.u32 %v775, 7
        %v777 = vsub.s32 0, %v776
        %v778 = vrot.slane %v773, %v777
        %v780 = vmul.f32 %v765, %v778
        %v781 = vmul.f32 %v766, %v778
        %v782 = vmul.f32 %v767, %v778
        %v783 = vmul.f32 %v768, %v778
        %v784 = vmul.f32 %v769, %v778
        %v785 = vmul.f32 %v770, %v778
        %v786 = vmul.f32 %v771, %v778
        %v787 = vmul.f32 %v772, %v778
        %v788 = vld [vmem:[%s3] sm:$0x1]
        %v790 = vlaneseq
        %v791 = vshrl.u32 %v790, 7
        %v792 = vsub.s32 0, %v791
        %v793 = vrot.slane %v788, %v792
        %v795 = vadd.f32 %v780, %v793
        %v796 = vadd.f32 %v781, %v793
        %v797 = vadd.f32 %v782, %v793
        %v798 = vadd.f32 %v783, %v793
        %v799 = vadd.f32 %v784, %v793
        %v800 = vadd.f32 %v785, %v793
        %v801 = vadd.f32 %v786, %v793
        %v802 = vadd.f32 %v787, %v793
        %v803 = vmul.f32 %v693, %v757
        %v804 = vmul.f32 %v694, %v758
        %v805 = vmul.f32 %v695, %v759
        %v806 = vmul.f32 %v696, %v760
        %v807 = vmul.f32 %v697, %v761
        %v808 = vmul.f32 %v698, %v762
        %v809 = vmul.f32 %v699, %v763
        %v810 = vmul.f32 %v700, %v764
        %v811 = vld [vmem:[%s2] sm:$0x1]
        %v813 = vlaneseq
        %v814 = vshrl.u32 %v813, 7
        %v815 = vsub.s32 0, %v814
        %v816 = vrot.slane %v811, %v815
        %v818 = vmul.f32 %v803, %v816
        %v819 = vmul.f32 %v804, %v816
        %v820 = vmul.f32 %v805, %v816
        %v821 = vmul.f32 %v806, %v816
        %v822 = vmul.f32 %v807, %v816
        %v823 = vmul.f32 %v808, %v816
        %v824 = vmul.f32 %v809, %v816
        %v825 = vmul.f32 %v810, %v816
        %v826 = vld [vmem:[%s4] sm:$0x1]
        %v828 = vlaneseq
        %v829 = vshrl.u32 %v828, 7
        %v830 = vsub.s32 0, %v829
        %v831 = vrot.slane %v826, %v830
        %v833 = vadd.f32 %v818, %v831
        %v834 = vadd.f32 %v819, %v831
        %v835 = vadd.f32 %v820, %v831
        %v836 = vadd.f32 %v821, %v831
        %v837 = vadd.f32 %v822, %v831
        %v838 = vadd.f32 %v823, %v831
        %v839 = vadd.f32 %v824, %v831
        %v840 = vadd.f32 %v825, %v831
        %v841 = vpack.c.bf16 %v796, %v795
        %v842 = vpack.c.bf16 %v798, %v797
        %v843 = vpack.c.bf16 %v800, %v799
        %v844 = vpack.c.bf16 %v802, %v801
        %v845 = vld [vmem:[%s5] sm:$0xf]
        %v846 = vld [vmem:[%s5 + $0x4] sm:$0xf]
        %v847 = vld [vmem:[%s5 + $0x8] sm:$0xf]
        %v848 = vld [vmem:[%s5 + $0xc] sm:$0xf]
        %v849 = vpack.c.bf16 %v834, %v833
        %v850 = vpack.c.bf16 %v836, %v835
        %v851 = vpack.c.bf16 %v838, %v837
        %v852 = vpack.c.bf16 %v840, %v839
        %v853 = vld [vmem:[%s6] sm:$0xf]
        %v854 = vld [vmem:[%s6 + $0x4] sm:$0xf]
        %v855 = vld [vmem:[%s6 + $0x8] sm:$0xf]
        %v856 = vld [vmem:[%s6 + $0xc] sm:$0xf]
        %v861 = vunpack.c.l.b16 %v853
        %v862 = vunpack.c.l.b16 %v854
        %v863 = vunpack.c.l.b16 %v855
        %v864 = vunpack.c.l.b16 %v856
        %v865 = vpack.c.b16 %v862, %v861
        %v866 = vpack.c.b16 %v864, %v863
        %v870 = vsel %vm588, %v849, 0
        %v873 = vsel %vm588, %v850, 0
        %v876 = vsel %vm588, %v851, 0
        %v879 = vsel %vm588, %v852, 0
        %881 = vmatprep.subr.bf16.mxu0 0
        %882 = vmatpush1.bf16.msra.mxu0 %v865
        %883 = vmatprep.subr.bf16.mxu0 0
        %884 = vmatpush1.bf16.msra.mxu0 %v866
        %885 = vmatprep.subr.bf16.mxu0 0
        %886 = vmatpush1.bf16.msra.mxu0 0
        %887 = vmatprep.subr.bf16.mxu0 0
        %888 = vmatpush1.bf16.msra.mxu0 0
        %889 = vmatprep.subr.bf16.mxu0 0
        %890 = vmatpush1.bf16.msra.mxu0 0
        %891 = vmatprep.subr.bf16.mxu0 0
        %892 = vmatpush1.bf16.msra.mxu0 0
        %893 = vmatprep.subr.bf16.mxu0 0
        %894 = vmatpush1.bf16.msra.mxu0 0
        %895 = vmatprep.subr.bf16.mxu0 0
        %896 = vmatpush1.bf16.msra.mxu0 0
        %897 = vmatprep.subr.bf16.mxu0 0
        %898 = vmatpush1.bf16.msra.mxu0 0
        %899 = vmatprep.subr.bf16.mxu0 0
        %900 = vmatpush1.bf16.msra.mxu0 0
        %901 = vmatprep.subr.bf16.mxu0 0
        %902 = vmatpush1.bf16.msra.mxu0 0
        %903 = vmatprep.subr.bf16.mxu0 0
        %904 = vmatpush1.bf16.msra.mxu0 0
        %905 = vmatprep.subr.bf16.mxu0 0
        %906 = vmatpush1.bf16.msra.mxu0 0
        %907 = vmatprep.subr.bf16.mxu0 0
        %908 = vmatpush1.bf16.msra.mxu0 0
        %909 = vmatprep.subr.bf16.mxu0 0
        %910 = vmatpush1.bf16.msra.mxu0 0
        %911 = vmatprep.subr.bf16.mxu0 0
        %912 = vmatpush1.bf16.msra.mxu0 0
        %913 = vmatprep.mubr.bf16.mxu0 0
        %914 = vmatmul.mubr.bf16.gmra.mrb[0].mxu0 %v870
        %v915 = vpop.f32.mrb[0].mxu0
        %v916 = vadd.f32 0.0, %v915
        %v917 = vpop.f32.mrb[0].mxu0
        %v918 = vpop.f32.mrb[0].mxu0
        %v919 = vadd.f32 0.0, %v918
        %v920 = vpop.f32.mrb[0].mxu0
        %921 = vmatprep.mubr.bf16.mxu0 0
        %922 = vmatmul.mubr.bf16.gmra.mrb[0].mxu0 %v873
        %v923 = vpop.f32.mrb[0].mxu0
        %v924 = vadd.f32 0.0, %v923
        %v925 = vpop.f32.mrb[0].mxu0
        %v926 = vpop.f32.mrb[0].mxu0
        %v927 = vadd.f32 0.0, %v926
        %v928 = vpop.f32.mrb[0].mxu0
        %929 = vmatprep.mubr.bf16.mxu0 0
        %930 = vmatmul.mubr.bf16.gmra.mrb[0].mxu0 %v876
        %v931 = vpop.f32.mrb[0].mxu0
        %v932 = vadd.f32 0.0, %v931
        %v933 = vpop.f32.mrb[0].mxu0
        %v934 = vpop.f32.mrb[0].mxu0
        %v935 = vadd.f32 0.0, %v934
        %v936 = vpop.f32.mrb[0].mxu0
        %937 = vmatprep.mubr.bf16.mxu0 0
        %938 = vmatmul.mubr.bf16.gmra.mrb[0].mxu0 %v879
        %v939 = vpop.f32.mrb[0].mxu0
        %v940 = vadd.f32 0.0, %v939
        %v941 = vpop.f32.mrb[0].mxu0
        %v942 = vpop.f32.mrb[0].mxu0
        %v943 = vadd.f32 0.0, %v942
        %v944 = vpop.f32.mrb[0].mxu0
        %945 = vdwg.mxu0
        %v950 = vunpack.c.l.b16 %v845
        %v951 = vunpack.c.l.b16 %v846
        %v952 = vunpack.c.l.b16 %v847
        %v953 = vunpack.c.l.b16 %v848
        %v954 = vpack.c.b16 %v951, %v950
        %v955 = vpack.c.b16 %v953, %v952
        %v959 = vsel %vm588, %v841, 0
        %v962 = vsel %vm588, %v842, 0
        %v965 = vsel %vm588, %v843, 0
        %v968 = vsel %vm588, %v844, 0
        %970 = vmatprep.subr.bf16.mxu0 0
        %971 = vmatpush1.bf16.msra.mxu0 %v954
        %972 = vmatprep.subr.bf16.mxu0 0
        %973 = vmatpush1.bf16.msra.mxu0 %v955
        %974 = vmatprep.subr.bf16.mxu0 0
        %975 = vmatpush1.bf16.msra.mxu0 0
        %976 = vmatprep.subr.bf16.mxu0 0
        %977 = vmatpush1.bf16.msra.mxu0 0
        %978 = vmatprep.subr.bf16.mxu0 0
        %979 = vmatpush1.bf16.msra.mxu0 0
        %980 = vmatprep.subr.bf16.mxu0 0
        %981 = vmatpush1.bf16.msra.mxu0 0
        %982 = vmatprep.subr.bf16.mxu0 0
        %983 = vmatpush1.bf16.msra.mxu0 0
        %984 = vmatprep.subr.bf16.mxu0 0
        %985 = vmatpush1.bf16.msra.mxu0 0
        %986 = vmatprep.subr.bf16.mxu0 0
        %987 = vmatpush1.bf16.msra.mxu0 0
        %988 = vmatprep.subr.bf16.mxu0 0
        %989 = vmatpush1.bf16.msra.mxu0 0
        %990 = vmatprep.subr.bf16.mxu0 0
        %991 = vmatpush1.bf16.msra.mxu0 0
        %992 = vmatprep.subr.bf16.mxu0 0
        %993 = vmatpush1.bf16.msra.mxu0 0
        %994 = vmatprep.subr.bf16.mxu0 0
        %995 = vmatpush1.bf16.msra.mxu0 0
        %996 = vmatprep.subr.bf16.mxu0 0
        %997 = vmatpush1.bf16.msra.mxu0 0
        %998 = vmatprep.subr.bf16.mxu0 0
        %999 = vmatpush1.bf16.msra.mxu0 0
        %1000 = vmatprep.subr.bf16.mxu0 0
        %1001 = vmatpush1.bf16.msra.mxu0 0
        %1002 = vmatprep.mubr.bf16.mxu0 0
        %1003 = vmatmul.mubr.bf16.gmra.mrb[0].mxu0 %v959
        %v1004 = vpop.f32.mrb[0].mxu0
        %v1005 = vadd.f32 %v916, %v1004
        %v1006 = vpop.f32.mrb[0].mxu0
        %v1007 = vpop.f32.mrb[0].mxu0
        %v1008 = vadd.f32 %v919, %v1007
        %v1009 = vpop.f32.mrb[0].mxu0
        %1010 = vmatprep.mubr.bf16.mxu0 0
        %1011 = vmatmul.mubr.bf16.gmra.mrb[0].mxu0 %v962
        %v1012 = vpop.f32.mrb[0].mxu0
        %v1013 = vadd.f32 %v924, %v1012
        %v1014 = vpop.f32.mrb[0].mxu0
        %v1015 = vpop.f32.mrb[0].mxu0
        %v1016 = vadd.f32 %v927, %v1015
        %v1017 = vpop.f32.mrb[0].mxu0
        %1018 = vmatprep.mubr.bf16.mxu0 0
        %1019 = vmatmul.mubr.bf16.gmra.mrb[0].mxu0 %v965
        %v1020 = vpop.f32.mrb[0].mxu0
        %v1021 = vadd.f32 %v932, %v1020
        %v1022 = vpop.f32.mrb[0].mxu0
        %v1023 = vpop.f32.mrb[0].mxu0
        %v1024 = vadd.f32 %v935, %v1023
        %v1025 = vpop.f32.mrb[0].mxu0
        %1026 = vmatprep.mubr.bf16.mxu0 0
        %1027 = vmatmul.mubr.bf16.gmra.mrb[0].mxu0 %v968
        %v1028 = vpop.f32.mrb[0].mxu0
        %v1029 = vadd.f32 %v940, %v1028
        %v1030 = vpop.f32.mrb[0].mxu0
        %v1031 = vpop.f32.mrb[0].mxu0
        %v1032 = vadd.f32 %v943, %v1031
        %v1033 = vpop.f32.mrb[0].mxu0
        %1034 = vdwg.mxu0
        %v1035 = vld [vmem:[%s7] sm:$0x1]
        %v1037 = vlaneseq
        %v1038 = vshrl.u32 %v1037, 7
        %v1039 = vsub.s32 0, %v1038
        %v1040 = vrot.slane %v1035, %v1039
        %v1042 = vadd.f32 %v1005, %v1040
        %v1043 = vadd.f32 %v1008, %v1040
        %v1044 = vadd.f32 %v1013, %v1040
        %v1045 = vadd.f32 %v1016, %v1040
        %v1046 = vadd.f32 %v1021, %v1040
        %v1047 = vadd.f32 %v1024, %v1040
        %v1048 = vadd.f32 %v1029, %v1040
        %v1049 = vadd.f32 %v1032, %v1040
        %v1058 = vcombine.high %v1042, %v1042
        %v1059 = vcombine.high %v1043, %v1043
        %v1060 = vcombine.high %v1044, %v1044
        %v1061 = vcombine.high %v1045, %v1045
        %v1062 = vcombine.high %v1046, %v1046
        %v1063 = vcombine.high %v1047, %v1047
        %v1064 = vcombine.high %v1048, %v1048
        %v1065 = vcombine.high %v1049, %v1049
        %v1066 = vlaneseq
        %v1067 = vshrl.u32 %v1066, 7
        %v1068 = vsub.s32 0, %v1067
        %v1069 = vrot.slane %v1042, %v1068
        %v1070 = vlaneseq
        %v1071 = vshrl.u32 %v1070, 7
        %v1072 = vsub.s32 0, %v1071
        %v1073 = vrot.slane %v1058, %v1072
        %v1074 = vlaneseq
        %v1075 = vshrl.u32 %v1074, 7
        %v1076 = vsub.s32 0, %v1075
        %v1077 = vrot.slane %v1043, %v1076
        %v1078 = vlaneseq
        %v1079 = vshrl.u32 %v1078, 7
        %v1080 = vsub.s32 0, %v1079
        %v1081 = vrot.slane %v1059, %v1080
        %v1082 = vlaneseq
        %v1083 = vshrl.u32 %v1082, 7
        %v1084 = vsub.s32 0, %v1083
        %v1085 = vrot.slane %v1044, %v1084
        %v1086 = vlaneseq
        %v1087 = vshrl.u32 %v1086, 7
        %v1088 = vsub.s32 0, %v1087
        %v1089 = vrot.slane %v1060, %v1088
        %v1090 = vlaneseq
        %v1091 = vshrl.u32 %v1090, 7
        %v1092 = vsub.s32 0, %v1091
        %v1093 = vrot.slane %v1045, %v1092
        %v1094 = vlaneseq
        %v1095 = vshrl.u32 %v1094, 7
        %v1096 = vsub.s32 0, %v1095
        %v1097 = vrot.slane %v1061, %v1096
        %v1098 = vlaneseq
        %v1099 = vshrl.u32 %v1098, 7
        %v1100 = vsub.s32 0, %v1099
        %v1101 = vrot.slane %v1046, %v1100
        %v1102 = vlaneseq
        %v1103 = vshrl.u32 %v1102, 7
        %v1104 = vsub.s32 0, %v1103
        %v1105 = vrot.slane %v1062, %v1104
        %v1106 = vlaneseq
        %v1107 = vshrl.u32 %v1106, 7
        %v1108 = vsub.s32 0, %v1107
        %v1109 = vrot.slane %v1047, %v1108
        %v1110 = vlaneseq
        %v1111 = vshrl.u32 %v1110, 7
        %v1112 = vsub.s32 0, %v1111
        %v1113 = vrot.slane %v1063, %v1112
        %v1114 = vlaneseq
        %v1115 = vshrl.u32 %v1114, 7
        %v1116 = vsub.s32 0, %v1115
        %v1117 = vrot.slane %v1048, %v1116
        %v1118 = vlaneseq
        %v1119 = vshrl.u32 %v1118, 7
        %v1120 = vsub.s32 0, %v1119
        %v1121 = vrot.slane %v1064, %v1120
        %v1122 = vlaneseq
        %v1123 = vshrl.u32 %v1122, 7
        %v1124 = vsub.s32 0, %v1123
        %v1125 = vrot.slane %v1049, %v1124
        %v1126 = vlaneseq
        %v1127 = vshrl.u32 %v1126, 7
        %v1128 = vsub.s32 0, %v1127
        %v1129 = vrot.slane %v1065, %v1128
        %vm1130 = vcmask 1041409
        %v1131 = vsel %vm1130, %v1073, %v1069
        %vm1132 = vcmask 1042434
        %v1133 = vsel %vm1132, %v1077, %v1131
        %vm1134 = vcmask 1043459
        %v1135 = vsel %vm1134, %v1081, %v1133
        %vm1136 = vcmask 1044484
        %v1137 = vsel %vm1136, %v1085, %v1135
        %vm1138 = vcmask 1045509
        %v1139 = vsel %vm1138, %v1089, %v1137
        %vm1140 = vcmask 1046534
        %v1141 = vsel %vm1140, %v1093, %v1139
        %vm1142 = vcmask 1047559
        %v1143 = vsel %vm1142, %v1097, %v1141
        %v1144 = vsel %vm1130, %v1105, %v1101
        %v1145 = vsel %vm1132, %v1109, %v1144
        %v1146 = vsel %vm1134, %v1113, %v1145
        %v1147 = vsel %vm1136, %v1117, %v1146
        %v1148 = vsel %vm1138, %v1121, %v1147
        %v1149 = vsel %vm1140, %v1125, %v1148
        %v1150 = vsel %vm1142, %v1129, %v1149
        %v1153 = vlaneseq
        %v1154 = vshrl.u32 %v1153, 7
        %v1155 = vsub.s32 1, %v1154
        %v1156 = vrot.slane %v1042, %v1155
        %v1157 = vlaneseq
        %v1158 = vshrl.u32 %v1157, 7
        %v1159 = vsub.s32 1, %v1158
        %v1160 = vrot.slane %v1058, %v1159
        %v1161 = vlaneseq
        %v1162 = vshrl.u32 %v1161, 7
        %v1163 = vsub.s32 1, %v1162
        %v1164 = vrot.slane %v1043, %v1163
        %v1165 = vlaneseq
        %v1166 = vshrl.u32 %v1165, 7
        %v1167 = vsub.s32 1, %v1166
        %v1168 = vrot.slane %v1059, %v1167
        %v1169 = vlaneseq
        %v1170 = vshrl.u32 %v1169, 7
        %v1171 = vsub.s32 1, %v1170
        %v1172 = vrot.slane %v1044, %v1171
        %v1173 = vlaneseq
        %v1174 = vshrl.u32 %v1173, 7
        %v1175 = vsub.s32 1, %v1174
        %v1176 = vrot.slane %v1060, %v1175
        %v1177 = vlaneseq
        %v1178 = vshrl.u32 %v1177, 7
        %v1179 = vsub.s32 1, %v1178
        %v1180 = vrot.slane %v1045, %v1179
        %v1181 = vlaneseq
        %v1182 = vshrl.u32 %v1181, 7
        %v1183 = vsub.s32 1, %v1182
        %v1184 = vrot.slane %v1061, %v1183
        %v1185 = vlaneseq
        %v1186 = vshrl.u32 %v1185, 7
        %v1187 = vsub.s32 1, %v1186
        %v1188 = vrot.slane %v1046, %v1187
        %v1189 = vlaneseq
        %v1190 = vshrl.u32 %v1189, 7
        %v1191 = vsub.s32 1, %v1190
        %v1192 = vrot.slane %v1062, %v1191
        %v1193 = vlaneseq
        %v1194 = vshrl.u32 %v1193, 7
        %v1195 = vsub.s32 1, %v1194
        %v1196 = vrot.slane %v1047, %v1195
        %v1197 = vlaneseq
        %v1198 = vshrl.u32 %v1197, 7
        %v1199 = vsub.s32 1, %v1198
        %v1200 = vrot.slane %v1063, %v1199
        %v1201 = vlaneseq
        %v1202 = vshrl.u32 %v1201, 7
        %v1203 = vsub.s32 1, %v1202
        %v1204 = vrot.slane %v1048, %v1203
        %v1205 = vlaneseq
        %v1206 = vshrl.u32 %v1205, 7
        %v1207 = vsub.s32 1, %v1206
        %v1208 = vrot.slane %v1064, %v1207
        %v1209 = vlaneseq
        %v1210 = vshrl.u32 %v1209, 7
        %v1211 = vsub.s32 1, %v1210
        %v1212 = vrot.slane %v1049, %v1211
        %v1213 = vlaneseq
        %v1214 = vshrl.u32 %v1213, 7
        %v1215 = vsub.s32 1, %v1214
        %v1216 = vrot.slane %v1065, %v1215
        %v1217 = vsel %vm1130, %v1160, %v1156
        %v1218 = vsel %vm1132, %v1164, %v1217
        %v1219 = vsel %vm1134, %v1168, %v1218
        %v1220 = vsel %vm1136, %v1172, %v1219
        %v1221 = vsel %vm1138, %v1176, %v1220
        %v1222 = vsel %vm1140, %v1180, %v1221
        %v1223 = vsel %vm1142, %v1184, %v1222
        %v1224 = vsel %vm1130, %v1192, %v1188
        %v1225 = vsel %vm1132, %v1196, %v1224
        %v1226 = vsel %vm1134, %v1200, %v1225
        %v1227 = vsel %vm1136, %v1204, %v1226
        %v1228 = vsel %vm1138, %v1208, %v1227
        %v1229 = vsel %vm1140, %v1212, %v1228
        %v1230 = vsel %vm1142, %v1216, %v1229
        %1231 = vrot.lane.b32.xlu0 %v1223, 32
        %v1232 = vpop.permute.xlu0 %1231
        %1233 = vrot.lane.b32.xlu0 %v1230, 32
        %v1234 = vpop.permute.xlu0 %1233
        %v1237 = vlaneseq
        %v1238 = vshrl.u32 %v1237, 7
        %v1239 = vsub.s32 2, %v1238
        %v1240 = vrot.slane %v1042, %v1239
        %v1241 = vlaneseq
        %v1242 = vshrl.u32 %v1241, 7
        %v1243 = vsub.s32 2, %v1242
        %v1244 = vrot.slane %v1058, %v1243
        %v1245 = vlaneseq
        %v1246 = vshrl.u32 %v1245, 7
        %v1247 = vsub.s32 2, %v1246
        %v1248 = vrot.slane %v1043, %v1247
        %v1249 = vlaneseq
        %v1250 = vshrl.u32 %v1249, 7
        %v1251 = vsub.s32 2, %v1250
        %v1252 = vrot.slane %v1059, %v1251
        %v1253 = vlaneseq
        %v1254 = vshrl.u32 %v1253, 7
        %v1255 = vsub.s32 2, %v1254
        %v1256 = vrot.slane %v1044, %v1255
        %v1257 = vlaneseq
        %v1258 = vshrl.u32 %v1257, 7
        %v1259 = vsub.s32 2, %v1258
        %v1260 = vrot.slane %v1060, %v1259
        %v1261 = vlaneseq
        %v1262 = vshrl.u32 %v1261, 7
        %v1263 = vsub.s32 2, %v1262
        %v1264 = vrot.slane %v1045, %v1263
        %v1265 = vlaneseq
        %v1266 = vshrl.u32 %v1265, 7
        %v1267 = vsub.s32 2, %v1266
        %v1268 = vrot.slane %v1061, %v1267
        %v1269 = vlaneseq
        %v1270 = vshrl.u32 %v1269, 7
        %v1271 = vsub.s32 2, %v1270
        %v1272 = vrot.slane %v1046, %v1271
        %v1273 = vlaneseq
        %v1274 = vshrl.u32 %v1273, 7
        %v1275 = vsub.s32 2, %v1274
        %v1276 = vrot.slane %v1062, %v1275
        %v1277 = vlaneseq
        %v1278 = vshrl.u32 %v1277, 7
        %v1279 = vsub.s32 2, %v1278
        %v1280 = vrot.slane %v1047, %v1279
        %v1281 = vlaneseq
        %v1282 = vshrl.u32 %v1281, 7
        %v1283 = vsub.s32 2, %v1282
        %v1284 = vrot.slane %v1063, %v1283
        %v1285 = vlaneseq
        %v1286 = vshrl.u32 %v1285, 7
        %v1287 = vsub.s32 2, %v1286
        %v1288 = vrot.slane %v1048, %v1287
        %v1289 = vlaneseq
        %v1290 = vshrl.u32 %v1289, 7
        %v1291 = vsub.s32 2, %v1290
        %v1292 = vrot.slane %v1064, %v1291
        %v1293 = vlaneseq
        %v1294 = vshrl.u32 %v1293, 7
        %v1295 = vsub.s32 2, %v1294
        %v1296 = vrot.slane %v1049, %v1295
        %v1297 = vlaneseq
        %v1298 = vshrl.u32 %v1297, 7
        %v1299 = vsub.s32 2, %v1298
        %v1300 = vrot.slane %v1065, %v1299
        %v1301 = vsel %vm1130, %v1244, %v1240
        %v1302 = vsel %vm1132, %v1248, %v1301
        %v1303 = vsel %vm1134, %v1252, %v1302
        %v1304 = vsel %vm1136, %v1256, %v1303
        %v1305 = vsel %vm1138, %v1260, %v1304
        %v1306 = vsel %vm1140, %v1264, %v1305
        %v1307 = vsel %vm1142, %v1268, %v1306
        %v1308 = vsel %vm1130, %v1276, %v1272
        %v1309 = vsel %vm1132, %v1280, %v1308
        %v1310 = vsel %vm1134, %v1284, %v1309
        %v1311 = vsel %vm1136, %v1288, %v1310
        %v1312 = vsel %vm1138, %v1292, %v1311
        %v1313 = vsel %vm1140, %v1296, %v1312
        %v1314 = vsel %vm1142, %v1300, %v1313
        %1315 = vrot.lane.b32.xlu0 %v1307, 64
        %v1316 = vpop.permute.xlu0 %1315
        %1317 = vrot.lane.b32.xlu0 %v1314, 64
        %v1318 = vpop.permute.xlu0 %1317
        %v1321 = vlaneseq
        %v1322 = vshrl.u32 %v1321, 7
        %v1323 = vsub.s32 3, %v1322
        %v1324 = vrot.slane %v1042, %v1323
        %v1325 = vlaneseq
        %v1326 = vshrl.u32 %v1325, 7
        %v1327 = vsub.s32 3, %v1326
        %v1328 = vrot.slane %v1058, %v1327
        %v1329 = vlaneseq
        %v1330 = vshrl.u32 %v1329, 7
        %v1331 = vsub.s32 3, %v1330
        %v1332 = vrot.slane %v1043, %v1331
        %v1333 = vlaneseq
        %v1334 = vshrl.u32 %v1333, 7
        %v1335 = vsub.s32 3, %v1334
        %v1336 = vrot.slane %v1059, %v1335
        %v1337 = vlaneseq
        %v1338 = vshrl.u32 %v1337, 7
        %v1339 = vsub.s32 3, %v1338
        %v1340 = vrot.slane %v1044, %v1339
        %v1341 = vlaneseq
        %v1342 = vshrl.u32 %v1341, 7
        %v1343 = vsub.s32 3, %v1342
        %v1344 = vrot.slane %v1060, %v1343
        %v1345 = vlaneseq
        %v1346 = vshrl.u32 %v1345, 7
        %v1347 = vsub.s32 3, %v1346
        %v1348 = vrot.slane %v1045, %v1347
        %v1349 = vlaneseq
        %v1350 = vshrl.u32 %v1349, 7
        %v1351 = vsub.s32 3, %v1350
        %v1352 = vrot.slane %v1061, %v1351
        %v1353 = vlaneseq
        %v1354 = vshrl.u32 %v1353, 7
        %v1355 = vsub.s32 3, %v1354
        %v1356 = vrot.slane %v1046, %v1355
        %v1357 = vlaneseq
        %v1358 = vshrl.u32 %v1357, 7
        %v1359 = vsub.s32 3, %v1358
        %v1360 = vrot.slane %v1062, %v1359
        %v1361 = vlaneseq
        %v1362 = vshrl.u32 %v1361, 7
        %v1363 = vsub.s32 3, %v1362
        %v1364 = vrot.slane %v1047, %v1363
        %v1365 = vlaneseq
        %v1366 = vshrl.u32 %v1365, 7
        %v1367 = vsub.s32 3, %v1366
        %v1368 = vrot.slane %v1063, %v1367
        %v1369 = vlaneseq
        %v1370 = vshrl.u32 %v1369, 7
        %v1371 = vsub.s32 3, %v1370
        %v1372 = vrot.slane %v1048, %v1371
        %v1373 = vlaneseq
        %v1374 = vshrl.u32 %v1373, 7
        %v1375 = vsub.s32 3, %v1374
        %v1376 = vrot.slane %v1064, %v1375
        %v1377 = vlaneseq
        %v1378 = vshrl.u32 %v1377, 7
        %v1379 = vsub.s32 3, %v1378
        %v1380 = vrot.slane %v1049, %v1379
        %v1381 = vlaneseq
        %v1382 = vshrl.u32 %v1381, 7
        %v1383 = vsub.s32 3, %v1382
        %v1384 = vrot.slane %v1065, %v1383
        %v1385 = vsel %vm1130, %v1328, %v1324
        %v1386 = vsel %vm1132, %v1332, %v1385
        %v1387 = vsel %vm1134, %v1336, %v1386
        %v1388 = vsel %vm1136, %v1340, %v1387
        %v1389 = vsel %vm1138, %v1344, %v1388
        %v1390 = vsel %vm1140, %v1348, %v1389
        %v1391 = vsel %vm1142, %v1352, %v1390
        %v1392 = vsel %vm1130, %v1360, %v1356
        %v1393 = vsel %vm1132, %v1364, %v1392
        %v1394 = vsel %vm1134, %v1368, %v1393
        %v1395 = vsel %vm1136, %v1372, %v1394
        %v1396 = vsel %vm1138, %v1376, %v1395
        %v1397 = vsel %vm1140, %v1380, %v1396
        %v1398 = vsel %vm1142, %v1384, %v1397
        %1399 = vrot.lane.b32.xlu0 %v1391, 96
        %v1400 = vpop.permute.xlu0 %1399
        %1401 = vrot.lane.b32.xlu0 %v1398, 96
        %v1402 = vpop.permute.xlu0 %1401
        %v1405 = vsel %vm588, %v1143, %v1232
        %v1406 = vsel %vm588, %v1150, %v1234
        %vm1407 = vcmask 523264
        %v1408 = vsel %vm1407, %v1405, %v1316
        %v1409 = vsel %vm1407, %v1406, %v1318
        %vm1410 = vcmask 785408
        %v1411 = vsel %vm1410, %v1408, %v1400
        %v1412 = vsel %vm1410, %v1409, %v1402
        %1413 = vst [vmem:[%s565] sm:$0xff] %v1411
        %1414 = vst [vmem:[%s565 + $0x8] sm:$0xff] %v1412
      $region92: #{swin_transformer_forward.1} parent=87 // pred_fallthru
        _
      %v1415 = vld [vmem:[%s8] sm:$0xff]
      %v1416 = vld [vmem:[%s8 + $0x8] sm:$0xff]
      %v1417 = vld [vmem:[%s8 + $0x10] sm:$0xff]
      %v1418 = vld [vmem:[%s8 + $0x18] sm:$0xff]
      %v1419 = vld [vmem:[%s8 + $0x20] sm:$0xff]
      %v1420 = vld [vmem:[%s8 + $0x28] sm:$0xff]
      %v1421 = vld [vmem:[%s8 + $0x30] sm:$0xff]
      %v1422 = vld [vmem:[%s8 + $0x38] sm:$0xff]
      %v1423 = vld [vmem:[%s8 + $0x40] sm:$0xff]
      %v1424 = vld [vmem:[%s8 + $0x48] sm:$0xff]
      %v1425 = vld [vmem:[%s8 + $0x50] sm:$0xff]
      %v1426 = vld [vmem:[%s8 + $0x58] sm:$0xff]
      %v1427 = vld [vmem:[%s8 + $0x60] sm:$0xff]
      %v1428 = vld [vmem:[%s8 + $0x68] sm:$0xff]
      %v1429 = vld [vmem:[%s8 + $0x70] sm:$0xff]
      %v1430 = vld [vmem:[%s8 + $0x78] sm:$0xff]
      %v1431 = vld [vmem:[%s565] sm:$0xff]
      %v1432 = vld [vmem:[%s565 + $0x8] sm:$0xff]
      %s1433 = scalar_lea.vmem %s9, %s33
      %v1434 = vld [vmem:[%s1433] sm:$0x1]
      %s1435 = scalar_lea.vmem %s10, %s33
      %v1436 = vld [vmem:[%s1435] sm:$0x1]
      %1437 = vmatprep.subr.mxu0 0.0
      %1438 = vmatpush1.msra.mxu0 %v1415
      %1439 = vmatprep.subr.mxu0 0.0
      %1440 = vmatpush1.msra.mxu0 %v1416
      %1441 = vmatprep.subr.mxu0 0.0
      %1442 = vmatpush1.msra.mxu0 %v1417
      %1443 = vmatprep.subr.mxu0 0.0
      %1444 = vmatpush1.msra.mxu0 %v1418
      %1445 = vmatprep.subr.mxu0 0.0
      %1446 = vmatpush1.msra.mxu0 %v1419
      %1447 = vmatprep.subr.mxu0 0.0
      %1448 = vmatpush1.msra.mxu0 %v1420
      %1449 = vmatprep.subr.mxu0 0.0
      %1450 = vmatpush1.msra.mxu0 %v1421
      %1451 = vmatprep.subr.mxu0 0.0
      %1452 = vmatpush1.msra.mxu0 %v1422
      %1453 = vmatprep.subr.mxu0 0.0
      %1454 = vmatpush1.msra.mxu0 %v1423
      %1455 = vmatprep.subr.mxu0 0.0
      %1456 = vmatpush1.msra.mxu0 %v1424
      %1457 = vmatprep.subr.mxu0 0.0
      %1458 = vmatpush1.msra.mxu0 %v1425
      %1459 = vmatprep.subr.mxu0 0.0
      %1460 = vmatpush1.msra.mxu0 %v1426
      %1461 = vmatprep.subr.mxu0 0.0
      %1462 = vmatpush1.msra.mxu0 %v1427
      %1463 = vmatprep.subr.mxu0 0.0
      %1464 = vmatpush1.msra.mxu0 %v1428
      %1465 = vmatprep.subr.mxu0 0.0
      %1466 = vmatpush1.msra.mxu0 %v1429
      %1467 = vmatprep.subr.mxu0 0.0
      %1468 = vmatpush1.msra.mxu0 %v1430
      %1469 = vmatprep.subr.mxu0 0.0
      %1470 = vmatpush1.msra.mxu0 0.0
      %1471 = vmatprep.subr.mxu0 0.0
      %1472 = vmatpush1.msra.mxu0 0.0
      %1473 = vmatprep.subr.mxu0 0.0
      %1474 = vmatpush1.msra.mxu0 0.0
      %1475 = vmatprep.subr.mxu0 0.0
      %1476 = vmatpush1.msra.mxu0 0.0
      %1477 = vmatprep.subr.mxu0 0.0
      %1478 = vmatpush1.msra.mxu0 0.0
      %1479 = vmatprep.subr.mxu0 0.0
      %1480 = vmatpush1.msra.mxu0 0.0
      %1481 = vmatprep.subr.mxu0 0.0
      %1482 = vmatpush1.msra.mxu0 0.0
      %1483 = vmatprep.subr.mxu0 0.0
      %1484 = vmatpush1.msra.mxu0 0.0
      %1485 = vmatprep.subr.mxu0 0.0
      %1486 = vmatpush1.msra.mxu0 0.0
      %1487 = vmatprep.subr.mxu0 0.0
      %1488 = vmatpush1.msra.mxu0 0.0
      %1489 = vmatprep.subr.mxu0 0.0
      %1490 = vmatpush1.msra.mxu0 0.0
      %1491 = vmatprep.subr.mxu0 0.0
      %1492 = vmatpush1.msra.mxu0 0.0
      %1493 = vmatprep.subr.mxu0 0.0
      %1494 = vmatpush1.msra.mxu0 0.0
      %1495 = vmatprep.subr.mxu0 0.0
      %1496 = vmatpush1.msra.mxu0 0.0
      %1497 = vmatprep.subr.mxu0 0.0
      %1498 = vmatpush1.msra.mxu0 0.0
      %1499 = vmatprep.subr.mxu0 0.0
      %1500 = vmatpush1.msra.mxu0 0.0
      %1501 = vmatprep.mubr.f32.mxu0 0.0
      %1502 = vmatmul.mubr.f32.gmra.mrb[0].mxu0 %v1431
      %v1503 = vpop.f32.mrb[0].mxu0
      %v1504 = vadd.f32 0.0, %v1503
      %v1505 = vpop.f32.mrb[0].mxu0
      %1506 = vmatprep.mubr.f32.mxu0 0.0
      %1507 = vmatmul.mubr.f32.gmra.mrb[0].mxu0 %v1432
      %v1508 = vpop.f32.mrb[0].mxu0
      %v1509 = vadd.f32 0.0, %v1508
      %v1510 = vpop.f32.mrb[0].mxu0
      %1511 = vdwg.mxu0
      %v1512 = vsub.f32 %v1431, %v1504
      %v1513 = vsub.f32 %v1432, %v1509
      %v1514 = vmul.f32 %v1512, %v1512
      %v1515 = vmul.f32 %v1513, %v1513
      %1516 = vmatprep.subr.mxu0 0.0
      %1517 = vmatpush1.msra.mxu0 %v1415
      %1518 = vmatprep.subr.mxu0 0.0
      %1519 = vmatpush1.msra.mxu0 %v1416
      %1520 = vmatprep.subr.mxu0 0.0
      %1521 = vmatpush1.msra.mxu0 %v1417
      %1522 = vmatprep.subr.mxu0 0.0
      %1523 = vmatpush1.msra.mxu0 %v1418
      %1524 = vmatprep.subr.mxu0 0.0
      %1525 = vmatpush1.msra.mxu0 %v1419
      %1526 = vmatprep.subr.mxu0 0.0
      %1527 = vmatpush1.msra.mxu0 %v1420
      %1528 = vmatprep.subr.mxu0 0.0
      %1529 = vmatpush1.msra.mxu0 %v1421
      %1530 = vmatprep.subr.mxu0 0.0
      %1531 = vmatpush1.msra.mxu0 %v1422
      %1532 = vmatprep.subr.mxu0 0.0
      %1533 = vmatpush1.msra.mxu0 %v1423
      %1534 = vmatprep.subr.mxu0 0.0
      %1535 = vmatpush1.msra.mxu0 %v1424
      %1536 = vmatprep.subr.mxu0 0.0
      %1537 = vmatpush1.msra.mxu0 %v1425
      %1538 = vmatprep.subr.mxu0 0.0
      %1539 = vmatpush1.msra.mxu0 %v1426
      %1540 = vmatprep.subr.mxu0 0.0
      %1541 = vmatpush1.msra.mxu0 %v1427
      %1542 = vmatprep.subr.mxu0 0.0
      %1543 = vmatpush1.msra.mxu0 %v1428
      %1544 = vmatprep.subr.mxu0 0.0
      %1545 = vmatpush1.msra.mxu0 %v1429
      %1546 = vmatprep.subr.mxu0 0.0
      %1547 = vmatpush1.msra.mxu0 %v1430
      %1548 = vmatprep.subr.mxu0 0.0
      %1549 = vmatpush1.msra.mxu0 0.0
      %1550 = vmatprep.subr.mxu0 0.0
      %1551 = vmatpush1.msra.mxu0 0.0
      %1552 = vmatprep.subr.mxu0 0.0
      %1553 = vmatpush1.msra.mxu0 0.0
      %1554 = vmatprep.subr.mxu0 0.0
      %1555 = vmatpush1.msra.mxu0 0.0
      %1556 = vmatprep.subr.mxu0 0.0
      %1557 = vmatpush1.msra.mxu0 0.0
      %1558 = vmatprep.subr.mxu0 0.0
      %1559 = vmatpush1.msra.mxu0 0.0
      %1560 = vmatprep.subr.mxu0 0.0
      %1561 = vmatpush1.msra.mxu0 0.0
      %1562 = vmatprep.subr.mxu0 0.0
      %1563 = vmatpush1.msra.mxu0 0.0
      %1564 = vmatprep.subr.mxu0 0.0
      %1565 = vmatpush1.msra.mxu0 0.0
      %1566 = vmatprep.subr.mxu0 0.0
      %1567 = vmatpush1.msra.mxu0 0.0
      %1568 = vmatprep.subr.mxu0 0.0
      %1569 = vmatpush1.msra.mxu0 0.0
      %1570 = vmatprep.subr.mxu0 0.0
      %1571 = vmatpush1.msra.mxu0 0.0
      %1572 = vmatprep.subr.mxu0 0.0
      %1573 = vmatpush1.msra.mxu0 0.0
      %1574 = vmatprep.subr.mxu0 0.0
      %1575 = vmatpush1.msra.mxu0 0.0
      %1576 = vmatprep.subr.mxu0 0.0
      %1577 = vmatpush1.msra.mxu0 0.0
      %1578 = vmatprep.subr.mxu0 0.0
      %1579 = vmatpush1.msra.mxu0 0.0
      %1580 = vmatprep.mubr.f32.mxu0 0.0
      %1581 = vmatmul.mubr.f32.gmra.mrb[0].mxu0 %v1514
      %v1582 = vpop.f32.mrb[0].mxu0
      %v1583 = vadd.f32 1e-05, %v1582
      %v1584 = vpop.f32.mrb[0].mxu0
      %1585 = vmatprep.mubr.f32.mxu0 0.0
      %1586 = vmatmul.mubr.f32.gmra.mrb[0].mxu0 %v1515
      %v1587 = vpop.f32.mrb[0].mxu0
      %v1588 = vadd.f32 1e-05, %v1587
      %v1589 = vpop.f32.mrb[0].mxu0
      %1590 = vdwg.mxu0
      %v1591 = vrsqrt.pop %v1583
      %v1592 = vrsqrt.pop %v1588
      %v1593 = vmul.f32 %v1512, %v1591
      %v1594 = vmul.f32 %v1513, %v1592
      %v1596 = vlaneseq
      %v1597 = vshrl.u32 %v1596, 7
      %v1598 = vsub.s32 0, %v1597
      %v1599 = vrot.slane %v1434, %v1598
      %v1601 = vmul.f32 %v1593, %v1599
      %v1602 = vmul.f32 %v1594, %v1599
      %v1604 = vlaneseq
      %v1605 = vshrl.u32 %v1604, 7
      %v1606 = vsub.s32 0, %v1605
      %v1607 = vrot.slane %v1436, %v1606
      %v1609 = vadd.f32 %v1601, %v1607
      %v1610 = vadd.f32 %v1602, %v1607
      %v1611 = vadd.f32 %v1431, %v1609
      %v1612 = vadd.f32 %v1432, %v1610
      %s1613 = scalar_lea.vmem %s11, %s33
      %v1614 = vld [vmem:[%s1613] sm:$0x1]
      %s1615 = scalar_lea.vmem %s12, %s33
      %v1616 = vld [vmem:[%s1615] sm:$0x1]
      %1617 = vmatprep.subr.mxu0 0.0
      %1618 = vmatpush1.msra.mxu0 %v1415
      %1619 = vmatprep.subr.mxu0 0.0
      %1620 = vmatpush1.msra.mxu0 %v1416
      %1621 = vmatprep.subr.mxu0 0.0
      %1622 = vmatpush1.msra.mxu0 %v1417
      %1623 = vmatprep.subr.mxu0 0.0
      %1624 = vmatpush1.msra.mxu0 %v1418
      %1625 = vmatprep.subr.mxu0 0.0
      %1626 = vmatpush1.msra.mxu0 %v1419
      %1627 = vmatprep.subr.mxu0 0.0
      %1628 = vmatpush1.msra.mxu0 %v1420
      %1629 = vmatprep.subr.mxu0 0.0
      %1630 = vmatpush1.msra.mxu0 %v1421
      %1631 = vmatprep.subr.mxu0 0.0
      %1632 = vmatpush1.msra.mxu0 %v1422
      %1633 = vmatprep.subr.mxu0 0.0
      %1634 = vmatpush1.msra.mxu0 %v1423
      %1635 = vmatprep.subr.mxu0 0.0
      %1636 = vmatpush1.msra.mxu0 %v1424
      %1637 = vmatprep.subr.mxu0 0.0
      %1638 = vmatpush1.msra.mxu0 %v1425
      %1639 = vmatprep.subr.mxu0 0.0
      %1640 = vmatpush1.msra.mxu0 %v1426
      %1641 = vmatprep.subr.mxu0 0.0
      %1642 = vmatpush1.msra.mxu0 %v1427
      %1643 = vmatprep.subr.mxu0 0.0
      %1644 = vmatpush1.msra.mxu0 %v1428
      %1645 = vmatprep.subr.mxu0 0.0
      %1646 = vmatpush1.msra.mxu0 %v1429
      %1647 = vmatprep.subr.mxu0 0.0
      %1648 = vmatpush1.msra.mxu0 %v1430
      %1649 = vmatprep.subr.mxu0 0.0
      %1650 = vmatpush1.msra.mxu0 0.0
      %1651 = vmatprep.subr.mxu0 0.0
      %1652 = vmatpush1.msra.mxu0 0.0
      %1653 = vmatprep.subr.mxu0 0.0
      %1654 = vmatpush1.msra.mxu0 0.0
      %1655 = vmatprep.subr.mxu0 0.0
      %1656 = vmatpush1.msra.mxu0 0.0
      %1657 = vmatprep.subr.mxu0 0.0
      %1658 = vmatpush1.msra.mxu0 0.0
      %1659 = vmatprep.subr.mxu0 0.0
      %1660 = vmatpush1.msra.mxu0 0.0
      %1661 = vmatprep.subr.mxu0 0.0
      %1662 = vmatpush1.msra.mxu0 0.0
      %1663 = vmatprep.subr.mxu0 0.0
      %1664 = vmatpush1.msra.mxu0 0.0
      %1665 = vmatprep.subr.mxu0 0.0
      %1666 = vmatpush1.msra.mxu0 0.0
      %1667 = vmatprep.subr.mxu0 0.0
      %1668 = vmatpush1.msra.mxu0 0.0
      %1669 = vmatprep.subr.mxu0 0.0
      %1670 = vmatpush1.msra.mxu0 0.0
      %1671 = vmatprep.subr.mxu0 0.0
      %1672 = vmatpush1.msra.mxu0 0.0
      %1673 = vmatprep.subr.mxu0 0.0
      %1674 = vmatpush1.msra.mxu0 0.0
      %1675 = vmatprep.subr.mxu0 0.0
      %1676 = vmatpush1.msra.mxu0 0.0
      %1677 = vmatprep.subr.mxu0 0.0
      %1678 = vmatpush1.msra.mxu0 0.0
      %1679 = vmatprep.subr.mxu0 0.0
      %1680 = vmatpush1.msra.mxu0 0.0
      %1681 = vmatprep.mubr.f32.mxu0 0.0
      %1682 = vmatmul.mubr.f32.gmra.mrb[0].mxu0 %v1611
      %v1683 = vpop.f32.mrb[0].mxu0
      %v1684 = vadd.f32 0.0, %v1683
      %v1685 = vpop.f32.mrb[0].mxu0
      %1686 = vmatprep.mubr.f32.mxu0 0.0
      %1687 = vmatmul.mubr.f32.gmra.mrb[0].mxu0 %v1612
      %v1688 = vpop.f32.mrb[0].mxu0
      %v1689 = vadd.f32 0.0, %v1688
      %v1690 = vpop.f32.mrb[0].mxu0
      %1691 = vdwg.mxu0
      %v1692 = vsub.f32 %v1611, %v1684
      %v1693 = vsub.f32 %v1612, %v1689
      %v1694 = vmul.f32 %v1692, %v1692
      %v1695 = vmul.f32 %v1693, %v1693
      %1696 = vmatprep.subr.mxu0 0.0
      %1697 = vmatpush1.msra.mxu0 %v1415
      %1698 = vmatprep.subr.mxu0 0.0
      %1699 = vmatpush1.msra.mxu0 %v1416
      %1700 = vmatprep.subr.mxu0 0.0
      %1701 = vmatpush1.msra.mxu0 %v1417
      %1702 = vmatprep.subr.mxu0 0.0
      %1703 = vmatpush1.msra.mxu0 %v1418
      %1704 = vmatprep.subr.mxu0 0.0
      %1705 = vmatpush1.msra.mxu0 %v1419
      %1706 = vmatprep.subr.mxu0 0.0
      %1707 = vmatpush1.msra.mxu0 %v1420
      %1708 = vmatprep.subr.mxu0 0.0
      %1709 = vmatpush1.msra.mxu0 %v1421
      %1710 = vmatprep.subr.mxu0 0.0
      %1711 = vmatpush1.msra.mxu0 %v1422
      %1712 = vmatprep.subr.mxu0 0.0
      %1713 = vmatpush1.msra.mxu0 %v1423
      %1714 = vmatprep.subr.mxu0 0.0
      %1715 = vmatpush1.msra.mxu0 %v1424
      %1716 = vmatprep.subr.mxu0 0.0
      %1717 = vmatpush1.msra.mxu0 %v1425
      %1718 = vmatprep.subr.mxu0 0.0
      %1719 = vmatpush1.msra.mxu0 %v1426
      %1720 = vmatprep.subr.mxu0 0.0
      %1721 = vmatpush1.msra.mxu0 %v1427
      %1722 = vmatprep.subr.mxu0 0.0
      %1723 = vmatpush1.msra.mxu0 %v1428
      %1724 = vmatprep.subr.mxu0 0.0
      %1725 = vmatpush1.msra.mxu0 %v1429
      %1726 = vmatprep.subr.mxu0 0.0
      %1727 = vmatpush1.msra.mxu0 %v1430
      %1728 = vmatprep.subr.mxu0 0.0
      %1729 = vmatpush1.msra.mxu0 0.0
      %1730 = vmatprep.subr.mxu0 0.0
      %1731 = vmatpush1.msra.mxu0 0.0
      %1732 = vmatprep.subr.mxu0 0.0
      %1733 = vmatpush1.msra.mxu0 0.0
      %1734 = vmatprep.subr.mxu0 0.0
      %1735 = vmatpush1.msra.mxu0 0.0
      %1736 = vmatprep.subr.mxu0 0.0
      %1737 = vmatpush1.msra.mxu0 0.0
      %1738 = vmatprep.subr.mxu0 0.0
      %1739 = vmatpush1.msra.mxu0 0.0
      %1740 = vmatprep.subr.mxu0 0.0
      %1741 = vmatpush1.msra.mxu0 0.0
      %1742 = vmatprep.subr.mxu0 0.0
      %1743 = vmatpush1.msra.mxu0 0.0
      %1744 = vmatprep.subr.mxu0 0.0
      %1745 = vmatpush1.msra.mxu0 0.0
      %1746 = vmatprep.subr.mxu0 0.0
      %1747 = vmatpush1.msra.mxu0 0.0
      %1748 = vmatprep.subr.mxu0 0.0
      %1749 = vmatpush1.msra.mxu0 0.0
      %1750 = vmatprep.subr.mxu0 0.0
      %1751 = vmatpush1.msra.mxu0 0.0
      %1752 = vmatprep.subr.mxu0 0.0
      %1753 = vmatpush1.msra.mxu0 0.0
      %1754 = vmatprep.subr.mxu0 0.0
      %1755 = vmatpush1.msra.mxu0 0.0
      %1756 = vmatprep.subr.mxu0 0.0
      %1757 = vmatpush1.msra.mxu0 0.0
      %1758 = vmatprep.subr.mxu0 0.0
      %1759 = vmatpush1.msra.mxu0 0.0
      %1760 = vmatprep.mubr.f32.mxu0 0.0
      %1761 = vmatmul.mubr.f32.gmra.mrb[0].mxu0 %v1694
      %v1762 = vpop.f32.mrb[0].mxu0
      %v1763 = vadd.f32 1e-05, %v1762
      %v1764 = vpop.f32.mrb[0].mxu0
      %1765 = vmatprep.mubr.f32.mxu0 0.0
      %1766 = vmatmul.mubr.f32.gmra.mrb[0].mxu0 %v1695
      %v1767 = vpop.f32.mrb[0].mxu0
      %v1768 = vadd.f32 1e-05, %v1767
      %v1769 = vpop.f32.mrb[0].mxu0
      %1770 = vdwg.mxu0
      %v1771 = vrsqrt.pop %v1763
      %v1772 = vrsqrt.pop %v1768
      %v1773 = vmul.f32 %v1692, %v1771
      %v1774 = vmul.f32 %v1693, %v1772
      %v1776 = vlaneseq
      %v1777 = vshrl.u32 %v1776, 7
      %v1778 = vsub.s32 0, %v1777
      %v1779 = vrot.slane %v1614, %v1778
      %v1781 = vmul.f32 %v1773, %v1779
      %v1782 = vmul.f32 %v1774, %v1779
      %v1784 = vlaneseq
      %v1785 = vshrl.u32 %v1784, 7
      %v1786 = vsub.s32 0, %v1785
      %v1787 = vrot.slane %v1616, %v1786
      %v1789 = vadd.f32 %v1781, %v1787
      %v1790 = vadd.f32 %v1782, %v1787
      %v1791 = vpack.c.bf16 %v1790, %v1789
      %s1792 = smul.u32 %s33, 64
      %s1793 = smul.addr %s1792, 4
      %s1794 = scalar_lea.vmem %s13, %s1793
      %v1795 = vld [vmem:[%s1794] sm:$0xff]
      %v1796 = vld [vmem:[%s1794 + $0x8] sm:$0xff]
      %v1797 = vld [vmem:[%s1794 + $0x10] sm:$0xff]
      %v1798 = vld [vmem:[%s1794 + $0x18] sm:$0xff]
      %v1799 = vld [vmem:[%s1794 + $0x20] sm:$0xff]
      %v1800 = vld [vmem:[%s1794 + $0x28] sm:$0xff]
      %v1801 = vld [vmem:[%s1794 + $0x30] sm:$0xff]
      %v1802 = vld [vmem:[%s1794 + $0x38] sm:$0xff]
      %v1803 = vld [vmem:[%s1794 + $0x40] sm:$0xff]
      %v1804 = vld [vmem:[%s1794 + $0x48] sm:$0xff]
      %v1805 = vld [vmem:[%s1794 + $0x50] sm:$0xff]
      %v1806 = vld [vmem:[%s1794 + $0x58] sm:$0xff]
      %v1807 = vld [vmem:[%s1794 + $0x60] sm:$0xff]
      %v1808 = vld [vmem:[%s1794 + $0x68] sm:$0xff]
      %v1809 = vld [vmem:[%s1794 + $0x70] sm:$0xff]
      %v1810 = vld [vmem:[%s1794 + $0x78] sm:$0xff]
      %v1811 = vld [vmem:[%s1794 + $0x80] sm:$0xff]
      %v1812 = vld [vmem:[%s1794 + $0x88] sm:$0xff]
      %v1813 = vld [vmem:[%s1794 + $0x90] sm:$0xff]
      %v1814 = vld [vmem:[%s1794 + $0x98] sm:$0xff]
      %v1815 = vld [vmem:[%s1794 + $0xa0] sm:$0xff]
      %v1816 = vld [vmem:[%s1794 + $0xa8] sm:$0xff]
      %v1817 = vld [vmem:[%s1794 + $0xb0] sm:$0xff]
      %v1818 = vld [vmem:[%s1794 + $0xb8] sm:$0xff]
      %v1819 = vld [vmem:[%s1794 + $0xc0] sm:$0xff]
      %v1820 = vld [vmem:[%s1794 + $0xc8] sm:$0xff]
      %v1821 = vld [vmem:[%s1794 + $0xd0] sm:$0xff]
      %v1822 = vld [vmem:[%s1794 + $0xd8] sm:$0xff]
      %v1823 = vld [vmem:[%s1794 + $0xe0] sm:$0xff]
      %v1824 = vld [vmem:[%s1794 + $0xe8] sm:$0xff]
      %v1825 = vld [vmem:[%s1794 + $0xf0] sm:$0xff]
      %v1826 = vld [vmem:[%s1794 + $0xf8] sm:$0xff]
      %s1827 = smul.u32 %s33, 4
      %s1828 = scalar_lea.vmem %s14, %s1827
      %v1829 = vld [vmem:[%s1828] sm:$0xf]
      %v1831 = vlaneseq
      %v1832 = vshrl.u32 %v1831, 7
      %v1833 = vsub.s32 0, %v1832
      %v1834 = vrot.slane %v1829, %v1833
      %v1835 = vlaneseq
      %v1836 = vshrl.u32 %v1835, 7
      %v1837 = vsub.s32 1, %v1836
      %v1838 = vrot.slane %v1829, %v1837
      %v1839 = vlaneseq
      %v1840 = vshrl.u32 %v1839, 7
      %v1841 = vsub.s32 2, %v1840
      %v1842 = vrot.slane %v1829, %v1841
      %v1843 = vlaneseq
      %v1844 = vshrl.u32 %v1843, 7
      %v1845 = vsub.s32 3, %v1844
      %v1846 = vrot.slane %v1829, %v1845
      %v1883 = vunpack.c.l.b16 %v1795
      %v1884 = vunpack.c.h.b16 %v1795
      %v1885 = vunpack.c.l.b16 %v1796
      %v1886 = vunpack.c.h.b16 %v1796
      %v1887 = vunpack.c.l.b16 %v1797
      %v1888 = vunpack.c.h.b16 %v1797
      %v1889 = vunpack.c.l.b16 %v1798
      %v1890 = vunpack.c.h.b16 %v1798
      %v1891 = vunpack.c.l.b16 %v1799
      %v1892 = vunpack.c.h.b16 %v1799
      %v1893 = vunpack.c.l.b16 %v1800
      %v1894 = vunpack.c.h.b16 %v1800
      %v1895 = vunpack.c.l.b16 %v1801
      %v1896 = vunpack.c.h.b16 %v1801
      %v1897 = vunpack.c.l.b16 %v1802
      %v1898 = vunpack.c.h.b16 %v1802
      %v1899 = vunpack.c.l.b16 %v1803
      %v1900 = vunpack.c.h.b16 %v1803
      %v1901 = vunpack.c.l.b16 %v1804
      %v1902 = vunpack.c.h.b16 %v1804
      %v1903 = vunpack.c.l.b16 %v1805
      %v1904 = vunpack.c.h.b16 %v1805
      %v1905 = vunpack.c.l.b16 %v1806
      %v1906 = vunpack.c.h.b16 %v1806
      %v1907 = vunpack.c.l.b16 %v1807
      %v1908 = vunpack.c.h.b16 %v1807
      %v1909 = vunpack.c.l.b16 %v1808
      %v1910 = vunpack.c.h.b16 %v1808
      %v1911 = vunpack.c.l.b16 %v1809
      %v1912 = vunpack.c.h.b16 %v1809
      %v1913 = vunpack.c.l.b16 %v1810
      %v1914 = vunpack.c.h.b16 %v1810
      %v1915 = vunpack.c.l.b16 %v1811
      %v1916 = vunpack.c.h.b16 %v1811
      %v1917 = vunpack.c.l.b16 %v1812
      %v1918 = vunpack.c.h.b16 %v1812
      %v1919 = vunpack.c.l.b16 %v1813
      %v1920 = vunpack.c.h.b16 %v1813
      %v1921 = vunpack.c.l.b16 %v1814
      %v1922 = vunpack.c.h.b16 %v1814
      %v1923 = vunpack.c.l.b16 %v1815
      %v1924 = vunpack.c.h.b16 %v1815
      %v1925 = vunpack.c.l.b16 %v1816
      %v1926 = vunpack.c.h.b16 %v1816
      %v1927 = vunpack.c.l.b16 %v1817
      %v1928 = vunpack.c.h.b16 %v1817
      %v1929 = vunpack.c.l.b16 %v1818
      %v1930 = vunpack.c.h.b16 %v1818
      %v1931 = vunpack.c.l.b16 %v1819
      %v1932 = vunpack.c.h.b16 %v1819
      %v1933 = vunpack.c.l.b16 %v1820
      %v1934 = vunpack.c.h.b16 %v1820
      %v1935 = vunpack.c.l.b16 %v1821
      %v1936 = vunpack.c.h.b16 %v1821
      %v1937 = vunpack.c.l.b16 %v1822
      %v1938 = vunpack.c.h.b16 %v1822
      %v1939 = vunpack.c.l.b16 %v1823
      %v1940 = vunpack.c.h.b16 %v1823
      %v1941 = vunpack.c.l.b16 %v1824
      %v1942 = vunpack.c.h.b16 %v1824
      %v1943 = vunpack.c.l.b16 %v1825
      %v1944 = vunpack.c.h.b16 %v1825
      %v1945 = vunpack.c.l.b16 %v1826
      %v1946 = vunpack.c.h.b16 %v1826
      %v1947 = vpack.c.b16 %v1887, %v1883
      %v1948 = vpack.c.b16 %v1888, %v1884
      %v1949 = vpack.c.b16 %v1889, %v1885
      %v1950 = vpack.c.b16 %v1890, %v1886
      %v1951 = vpack.c.b16 %v1895, %v1891
      %v1952 = vpack.c.b16 %v1896, %v1892
      %v1953 = vpack.c.b16 %v1897, %v1893
      %v1954 = vpack.c.b16 %v1898, %v1894
      %v1955 = vpack.c.b16 %v1903, %v1899
      %v1956 = vpack.c.b16 %v1904, %v1900
      %v1957 = vpack.c.b16 %v1905, %v1901
      %v1958 = vpack.c.b16 %v1906, %v1902
      %v1959 = vpack.c.b16 %v1911, %v1907
      %v1960 = vpack.c.b16 %v1912, %v1908
      %v1961 = vpack.c.b16 %v1913, %v1909
      %v1962 = vpack.c.b16 %v1914, %v1910
      %v1963 = vpack.c.b16 %v1919, %v1915
      %v1964 = vpack.c.b16 %v1920, %v1916
      %v1965 = vpack.c.b16 %v1921, %v1917
      %v1966 = vpack.c.b16 %v1922, %v1918
      %v1967 = vpack.c.b16 %v1927, %v1923
      %v1968 = vpack.c.b16 %v1928, %v1924
      %v1969 = vpack.c.b16 %v1929, %v1925
      %v1970 = vpack.c.b16 %v1930, %v1926
      %v1971 = vpack.c.b16 %v1935, %v1931
      %v1972 = vpack.c.b16 %v1936, %v1932
      %v1973 = vpack.c.b16 %v1937, %v1933
      %v1974 = vpack.c.b16 %v1938, %v1934
      %v1975 = vpack.c.b16 %v1943, %v1939
      %v1976 = vpack.c.b16 %v1944, %v1940
      %v1977 = vpack.c.b16 %v1945, %v1941
      %v1978 = vpack.c.b16 %v1946, %v1942
      %2011 = vmatprep.subr.bf16.mxu0 %v1948
      %2012 = vmatpush1.bf16.msra.mxu0 %v1947
      %2013 = vmatprep.subr.bf16.mxu0 %v1952
      %2014 = vmatpush1.bf16.msra.mxu0 %v1951
      %2015 = vmatprep.subr.bf16.mxu0 %v1956
      %2016 = vmatpush1.bf16.msra.mxu0 %v1955
      %2017 = vmatprep.subr.bf16.mxu0 %v1960
      %2018 = vmatpush1.bf16.msra.mxu0 %v1959
      %2019 = vmatprep.subr.bf16.mxu0 %v1964
      %2020 = vmatpush1.bf16.msra.mxu0 %v1963
      %2021 = vmatprep.subr.bf16.mxu0 %v1968
      %2022 = vmatpush1.bf16.msra.mxu0 %v1967
      %2023 = vmatprep.subr.bf16.mxu0 %v1972
      %2024 = vmatpush1.bf16.msra.mxu0 %v1971
      %2025 = vmatprep.subr.bf16.mxu0 %v1976
      %2026 = vmatpush1.bf16.msra.mxu0 %v1975
      %2027 = vmatprep.subr.bf16.mxu0 0
      %2028 = vmatpush1.bf16.msra.mxu0 0
      %2029 = vmatprep.subr.bf16.mxu0 0
      %2030 = vmatpush1.bf16.msra.mxu0 0
      %2031 = vmatprep.subr.bf16.mxu0 0
      %2032 = vmatpush1.bf16.msra.mxu0 0
      %2033 = vmatprep.subr.bf16.mxu0 0
      %2034 = vmatpush1.bf16.msra.mxu0 0
      %2035 = vmatprep.subr.bf16.mxu0 0
      %2036 = vmatpush1.bf16.msra.mxu0 0
      %2037 = vmatprep.subr.bf16.mxu0 0
      %2038 = vmatpush1.bf16.msra.mxu0 0
      %2039 = vmatprep.subr.bf16.mxu0 0
      %2040 = vmatpush1.bf16.msra.mxu0 0
      %2041 = vmatprep.subr.bf16.mxu0 0
      %2042 = vmatpush1.bf16.msra.mxu0 0
      %2043 = vmatprep.mubr.bf16.mxu0 0
      %2044 = vmatmul.mubr.bf16.gmra.mrb[0].mxu0 %v1791
      %v2045 = vpop.f32.mrb[0].mxu0
      %v2046 = vadd.f32 %v1834, %v2045
      %v2047 = vpop.f32.mrb[0].mxu0
      %v2048 = vadd.f32 %v1838, %v2047
      %v2049 = vpop.f32.mrb[0].mxu0
      %v2050 = vadd.f32 %v1834, %v2049
      %v2051 = vpop.f32.mrb[0].mxu0
      %v2052 = vadd.f32 %v1838, %v2051
      %2053 = vdwg.mxu0
      %2054 = vmatprep.subr.bf16.mxu0 %v1950
      %2055 = vmatpush1.bf16.msra.mxu0 %v1949
      %2056 = vmatprep.subr.bf16.mxu0 %v1954
      %2057 = vmatpush1.bf16.msra.mxu0 %v1953
      %2058 = vmatprep.subr.bf16.mxu0 %v1958
      %2059 = vmatpush1.bf16.msra.mxu0 %v1957
      %2060 = vmatprep.subr.bf16.mxu0 %v1962
      %2061 = vmatpush1.bf16.msra.mxu0 %v1961
      %2062 = vmatprep.subr.bf16.mxu0 %v1966
      %2063 = vmatpush1.bf16.msra.mxu0 %v1965
      %2064 = vmatprep.subr.bf16.mxu0 %v1970
      %2065 = vmatpush1.bf16.msra.mxu0 %v1969
      %2066 = vmatprep.subr.bf16.mxu0 %v1974
      %2067 = vmatpush1.bf16.msra.mxu0 %v1973
      %2068 = vmatprep.subr.bf16.mxu0 %v1978
      %2069 = vmatpush1.bf16.msra.mxu0 %v1977
      %2070 = vmatprep.subr.bf16.mxu0 0
      %2071 = vmatpush1.bf16.msra.mxu0 0
      %2072 = vmatprep.subr.bf16.mxu0 0
      %2073 = vmatpush1.bf16.msra.mxu0 0
      %2074 = vmatprep.subr.bf16.mxu0 0
      %2075 = vmatpush1.bf16.msra.mxu0 0
      %2076 = vmatprep.subr.bf16.mxu0 0
      %2077 = vmatpush1.bf16.msra.mxu0 0
      %2078 = vmatprep.subr.bf16.mxu0 0
      %2079 = vmatpush1.bf16.msra.mxu0 0
      %2080 = vmatprep.subr.bf16.mxu0 0
      %2081 = vmatpush1.bf16.msra.mxu0 0
      %2082 = vmatprep.subr.bf16.mxu0 0
      %2083 = vmatpush1.bf16.msra.mxu0 0
      %2084 = vmatprep.subr.bf16.mxu0 0
      %2085 = vmatpush1.bf16.msra.mxu0 0
      %2086 = vmatprep.mubr.bf16.mxu0 0
      %2087 = vmatmul.mubr.bf16.gmra.mrb[0].mxu0 %v1791
      %v2088 = vpop.f32.mrb[0].mxu0
      %v2089 = vadd.f32 %v1842, %v2088
      %v2090 = vpop.f32.mrb[0].mxu0
      %v2091 = vadd.f32 %v1846, %v2090
      %v2092 = vpop.f32.mrb[0].mxu0
      %v2093 = vadd.f32 %v1842, %v2092
      %v2094 = vpop.f32.mrb[0].mxu0
      %v2095 = vadd.f32 %v1846, %v2094
      %2096 = vdwg.mxu0
      %v2097 = vmul.f32 %v2046, 0.5
      %v2098 = vmul.f32 %v2048, 0.5
      %v2099 = vmul.f32 %v2089, 0.5
      %v2100 = vmul.f32 %v2091, 0.5
      %v2101 = vmul.f32 %v2050, 0.5
      %v2102 = vmul.f32 %v2052, 0.5
      %v2103 = vmul.f32 %v2093, 0.5
      %v2104 = vmul.f32 %v2095, 0.5
      %v2105 = vmul.f32 %v2046, 0.044715
      %v2106 = vmul.f32 %v2048, 0.044715
      %v2107 = vmul.f32 %v2089, 0.044715
      %v2108 = vmul.f32 %v2091, 0.044715
      %v2109 = vmul.f32 %v2050, 0.044715
      %v2110 = vmul.f32 %v2052, 0.044715
      %v2111 = vmul.f32 %v2093, 0.044715
      %v2112 = vmul.f32 %v2095, 0.044715
      %v2113 = vmul.f32 %v2105, %v2046
      %v2114 = vmul.f32 %v2106, %v2048
      %v2115 = vmul.f32 %v2107, %v2089
      %v2116 = vmul.f32 %v2108, %v2091
      %v2117 = vmul.f32 %v2109, %v2050
      %v2118 = vmul.f32 %v2110, %v2052
      %v2119 = vmul.f32 %v2111, %v2093
      %v2120 = vmul.f32 %v2112, %v2095
      %v2121 = vmul.f32 %v2113, %v2046
      %v2122 = vmul.f32 %v2114, %v2048
      %v2123 = vmul.f32 %v2115, %v2089
      %v2124 = vmul.f32 %v2116, %v2091
      %v2125 = vmul.f32 %v2117, %v2050
      %v2126 = vmul.f32 %v2118, %v2052
      %v2127 = vmul.f32 %v2119, %v2093
      %v2128 = vmul.f32 %v2120, %v2095
      %v2129 = vadd.f32 %v2046, %v2121
      %v2130 = vadd.f32 %v2048, %v2122
      %v2131 = vadd.f32 %v2089, %v2123
      %v2132 = vadd.f32 %v2091, %v2124
      %v2133 = vadd.f32 %v2050, %v2125
      %v2134 = vadd.f32 %v2052, %v2126
      %v2135 = vadd.f32 %v2093, %v2127
      %v2136 = vadd.f32 %v2095, %v2128
      %v2137 = vmul.f32 %v2129, 0.7978846
      %v2138 = vmul.f32 %v2130, 0.7978846
      %v2139 = vmul.f32 %v2131, 0.7978846
      %v2140 = vmul.f32 %v2132, 0.7978846
      %v2141 = vmul.f32 %v2133, 0.7978846
      %v2142 = vmul.f32 %v2134, 0.7978846
      %v2143 = vmul.f32 %v2135, 0.7978846
      %v2144 = vmul.f32 %v2136, 0.7978846
      %v2145 = vtanh.pop %v2137
      %v2146 = vtanh.pop %v2138
      %v2147 = vtanh.pop %v2139
      %v2148 = vtanh.pop %v2140
      %v2149 = vtanh.pop %v2141
      %v2150 = vtanh.pop %v2142
      %v2151 = vtanh.pop %v2143
      %v2152 = vtanh.pop %v2144
      %v2153 = vadd.f32 %v2145, 1.0
      %v2154 = vadd.f32 %v2146, 1.0
      %v2155 = vadd.f32 %v2147, 1.0
      %v2156 = vadd.f32 %v2148, 1.0
      %v2157 = vadd.f32 %v2149, 1.0
      %v2158 = vadd.f32 %v2150, 1.0
      %v2159 = vadd.f32 %v2151, 1.0
      %v2160 = vadd.f32 %v2152, 1.0
      %v2161 = vmul.f32 %v2097, %v2153
      %v2162 = vmul.f32 %v2098, %v2154
      %v2163 = vmul.f32 %v2099, %v2155
      %v2164 = vmul.f32 %v2100, %v2156
      %v2165 = vmul.f32 %v2101, %v2157
      %v2166 = vmul.f32 %v2102, %v2158
      %v2167 = vmul.f32 %v2103, %v2159
      %v2168 = vmul.f32 %v2104, %v2160
      %v2169 = vpack.c.bf16 %v2165, %v2161
      %v2170 = vpack.c.bf16 %v2166, %v2162
      %v2171 = vpack.c.bf16 %v2167, %v2163
      %v2172 = vpack.c.bf16 %v2168, %v2164
      %s2173 = smul.addr %s1792, 4
      %s2174 = scalar_lea.vmem %s15, %s2173
      %v2175 = vld [vmem:[%s2174] sm:$0xf]
      %v2176 = vld [vmem:[%s2174 + $0x4] sm:$0xf]
      %v2177 = vld [vmem:[%s2174 + $0x8] sm:$0xf]
      %v2178 = vld [vmem:[%s2174 + $0xc] sm:$0xf]
      %v2179 = vld [vmem:[%s2174 + $0x10] sm:$0xf]
      %v2180 = vld [vmem:[%s2174 + $0x14] sm:$0xf]
      %v2181 = vld [vmem:[%s2174 + $0x18] sm:$0xf]
      %v2182 = vld [vmem:[%s2174 + $0x1c] sm:$0xf]
      %v2183 = vld [vmem:[%s2174 + $0x20] sm:$0xf]
      %v2184 = vld [vmem:[%s2174 + $0x24] sm:$0xf]
      %v2185 = vld [vmem:[%s2174 + $0x28] sm:$0xf]
      %v2186 = vld [vmem:[%s2174 + $0x2c] sm:$0xf]
      %v2187 = vld [vmem:[%s2174 + $0x30] sm:$0xf]
      %v2188 = vld [vmem:[%s2174 + $0x34] sm:$0xf]
      %v2189 = vld [vmem:[%s2174 + $0x38] sm:$0xf]
      %v2190 = vld [vmem:[%s2174 + $0x3c] sm:$0xf]
      %v2191 = vld [vmem:[%s2174 + $0x40] sm:$0xf]
      %v2192 = vld [vmem:[%s2174 + $0x44] sm:$0xf]
      %v2193 = vld [vmem:[%s2174 + $0x48] sm:$0xf]
      %v2194 = vld [vmem:[%s2174 + $0x4c] sm:$0xf]
      %v2195 = vld [vmem:[%s2174 + $0x50] sm:$0xf]
      %v2196 = vld [vmem:[%s2174 + $0x54] sm:$0xf]
      %v2197 = vld [vmem:[%s2174 + $0x58] sm:$0xf]
      %v2198 = vld [vmem:[%s2174 + $0x5c] sm:$0xf]
      %v2199 = vld [vmem:[%s2174 + $0x60] sm:$0xf]
      %v2200 = vld [vmem:[%s2174 + $0x64] sm:$0xf]
      %v2201 = vld [vmem:[%s2174 + $0x68] sm:$0xf]
      %v2202 = vld [vmem:[%s2174 + $0x6c] sm:$0xf]
      %v2203 = vld [vmem:[%s2174 + $0x70] sm:$0xf]
      %v2204 = vld [vmem:[%s2174 + $0x74] sm:$0xf]
      %v2205 = vld [vmem:[%s2174 + $0x78] sm:$0xf]
      %v2206 = vld [vmem:[%s2174 + $0x7c] sm:$0xf]
      %v2207 = vld [vmem:[%s2174 + $0x80] sm:$0xf]
      %v2208 = vld [vmem:[%s2174 + $0x84] sm:$0xf]
      %v2209 = vld [vmem:[%s2174 + $0x88] sm:$0xf]
      %v2210 = vld [vmem:[%s2174 + $0x8c] sm:$0xf]
      %v2211 = vld [vmem:[%s2174 + $0x90] sm:$0xf]
      %v2212 = vld [vmem:[%s2174 + $0x94] sm:$0xf]
      %v2213 = vld [vmem:[%s2174 + $0x98] sm:$0xf]
      %v2214 = vld [vmem:[%s2174 + $0x9c] sm:$0xf]
      %v2215 = vld [vmem:[%s2174 + $0xa0] sm:$0xf]
      %v2216 = vld [vmem:[%s2174 + $0xa4] sm:$0xf]
      %v2217 = vld [vmem:[%s2174 + $0xa8] sm:$0xf]
      %v2218 = vld [vmem:[%s2174 + $0xac] sm:$0xf]
      %v2219 = vld [vmem:[%s2174 + $0xb0] sm:$0xf]
      %v2220 = vld [vmem:[%s2174 + $0xb4] sm:$0xf]
      %v2221 = vld [vmem:[%s2174 + $0xb8] sm:$0xf]
      %v2222 = vld [vmem:[%s2174 + $0xbc] sm:$0xf]
      %v2223 = vld [vmem:[%s2174 + $0xc0] sm:$0xf]
      %v2224 = vld [vmem:[%s2174 + $0xc4] sm:$0xf]
      %v2225 = vld [vmem:[%s2174 + $0xc8] sm:$0xf]
      %v2226 = vld [vmem:[%s2174 + $0xcc] sm:$0xf]
      %v2227 = vld [vmem:[%s2174 + $0xd0] sm:$0xf]
      %v2228 = vld [vmem:[%s2174 + $0xd4] sm:$0xf]
      %v2229 = vld [vmem:[%s2174 + $0xd8] sm:$0xf]
      %v2230 = vld [vmem:[%s2174 + $0xdc] sm:$0xf]
      %v2231 = vld [vmem:[%s2174 + $0xe0] sm:$0xf]
      %v2232 = vld [vmem:[%s2174 + $0xe4] sm:$0xf]
      %v2233 = vld [vmem:[%s2174 + $0xe8] sm:$0xf]
      %v2234 = vld [vmem:[%s2174 + $0xec] sm:$0xf]
      %v2235 = vld [vmem:[%s2174 + $0xf0] sm:$0xf]
      %v2236 = vld [vmem:[%s2174 + $0xf4] sm:$0xf]
      %v2237 = vld [vmem:[%s2174 + $0xf8] sm:$0xf]
      %v2238 = vld [vmem:[%s2174 + $0xfc] sm:$0xf]
      %v2303 = vunpack.c.l.b16 %v2175
      %v2304 = vunpack.c.l.b16 %v2176
      %v2305 = vunpack.c.l.b16 %v2177
      %v2306 = vunpack.c.l.b16 %v2178
      %v2307 = vunpack.c.l.b16 %v2179
      %v2308 = vunpack.c.l.b16 %v2180
      %v2309 = vunpack.c.l.b16 %v2181
      %v2310 = vunpack.c.l.b16 %v2182
      %v2311 = vunpack.c.l.b16 %v2183
      %v2312 = vunpack.c.l.b16 %v2184
      %v2313 = vunpack.c.l.b16 %v2185
      %v2314 = vunpack.c.l.b16 %v2186
      %v2315 = vunpack.c.l.b16 %v2187
      %v2316 = vunpack.c.l.b16 %v2188
      %v2317 = vunpack.c.l.b16 %v2189
      %v2318 = vunpack.c.l.b16 %v2190
      %v2319 = vunpack.c.l.b16 %v2191
      %v2320 = vunpack.c.l.b16 %v2192
      %v2321 = vunpack.c.l.b16 %v2193
      %v2322 = vunpack.c.l.b16 %v2194
      %v2323 = vunpack.c.l.b16 %v2195
      %v2324 = vunpack.c.l.b16 %v2196
      %v2325 = vunpack.c.l.b16 %v2197
      %v2326 = vunpack.c.l.b16 %v2198
      %v2327 = vunpack.c.l.b16 %v2199
      %v2328 = vunpack.c.l.b16 %v2200
      %v2329 = vunpack.c.l.b16 %v2201
      %v2330 = vunpack.c.l.b16 %v2202
      %v2331 = vunpack.c.l.b16 %v2203
      %v2332 = vunpack.c.l.b16 %v2204
      %v2333 = vunpack.c.l.b16 %v2205
      %v2334 = vunpack.c.l.b16 %v2206
      %v2335 = vunpack.c.l.b16 %v2207
      %v2336 = vunpack.c.l.b16 %v2208
      %v2337 = vunpack.c.l.b16 %v2209
      %v2338 = vunpack.c.l.b16 %v2210
      %v2339 = vunpack.c.l.b16 %v2211
      %v2340 = vunpack.c.l.b16 %v2212
      %v2341 = vunpack.c.l.b16 %v2213
      %v2342 = vunpack.c.l.b16 %v2214
      %v2343 = vunpack.c.l.b16 %v2215
      %v2344 = vunpack.c.l.b16 %v2216
      %v2345 = vunpack.c.l.b16 %v2217
      %v2346 = vunpack.c.l.b16 %v2218
      %v2347 = vunpack.c.l.b16 %v2219
      %v2348 = vunpack.c.l.b16 %v2220
      %v2349 = vunpack.c.l.b16 %v2221
      %v2350 = vunpack.c.l.b16 %v2222
      %v2351 = vunpack.c.l.b16 %v2223
      %v2352 = vunpack.c.l.b16 %v2224
      %v2353 = vunpack.c.l.b16 %v2225
      %v2354 = vunpack.c.l.b16 %v2226
      %v2355 = vunpack.c.l.b16 %v2227
      %v2356 = vunpack.c.l.b16 %v2228
      %v2357 = vunpack.c.l.b16 %v2229
      %v2358 = vunpack.c.l.b16 %v2230
      %v2359 = vunpack.c.l.b16 %v2231
      %v2360 = vunpack.c.l.b16 %v2232
      %v2361 = vunpack.c.l.b16 %v2233
      %v2362 = vunpack.c.l.b16 %v2234
      %v2363 = vunpack.c.l.b16 %v2235
      %v2364 = vunpack.c.l.b16 %v2236
      %v2365 = vunpack.c.l.b16 %v2237
      %v2366 = vunpack.c.l.b16 %v2238
      %v2367 = vpack.c.b16 %v2304, %v2303
      %v2368 = vpack.c.b16 %v2306, %v2305
      %v2369 = vpack.c.b16 %v2308, %v2307
      %v2370 = vpack.c.b16 %v2310, %v2309
      %v2371 = vpack.c.b16 %v2312, %v2311
      %v2372 = vpack.c.b16 %v2314, %v2313
      %v2373 = vpack.c.b16 %v2316, %v2315
      %v2374 = vpack.c.b16 %v2318, %v2317
      %v2375 = vpack.c.b16 %v2320, %v2319
      %v2376 = vpack.c.b16 %v2322, %v2321
      %v2377 = vpack.c.b16 %v2324, %v2323
      %v2378 = vpack.c.b16 %v2326, %v2325
      %v2379 = vpack.c.b16 %v2328, %v2327
      %v2380 = vpack.c.b16 %v2330, %v2329
      %v2381 = vpack.c.b16 %v2332, %v2331
      %v2382 = vpack.c.b16 %v2334, %v2333
      %v2383 = vpack.c.b16 %v2336, %v2335
      %v2384 = vpack.c.b16 %v2338, %v2337
      %v2385 = vpack.c.b16 %v2340, %v2339
      %v2386 = vpack.c.b16 %v2342, %v2341
      %v2387 = vpack.c.b16 %v2344, %v2343
      %v2388 = vpack.c.b16 %v2346, %v2345
      %v2389 = vpack.c.b16 %v2348, %v2347
      %v2390 = vpack.c.b16 %v2350, %v2349
      %v2391 = vpack.c.b16 %v2352, %v2351
      %v2392 = vpack.c.b16 %v2354, %v2353
      %v2393 = vpack.c.b16 %v2356, %v2355
      %v2394 = vpack.c.b16 %v2358, %v2357
      %v2395 = vpack.c.b16 %v2360, %v2359
      %v2396 = vpack.c.b16 %v2362, %v2361
      %v2397 = vpack.c.b16 %v2364, %v2363
      %v2398 = vpack.c.b16 %v2366, %v2365
      %2431 = vmatprep.subr.bf16.mxu0 0
      %2432 = vmatpush1.bf16.msra.mxu0 %v2367
      %2433 = vmatprep.subr.bf16.mxu0 0
      %2434 = vmatpush1.bf16.msra.mxu0 %v2368
      %2435 = vmatprep.subr.bf16.mxu0 0
      %2436 = vmatpush1.bf16.msra.mxu0 %v2369
      %2437 = vmatprep.subr.bf16.mxu0 0
      %2438 = vmatpush1.bf16.msra.mxu0 %v2370
      %2439 = vmatprep.subr.bf16.mxu0 0
      %2440 = vmatpush1.bf16.msra.mxu0 %v2371
      %2441 = vmatprep.subr.bf16.mxu0 0
      %2442 = vmatpush1.bf16.msra.mxu0 %v2372
      %2443 = vmatprep.subr.bf16.mxu0 0
      %2444 = vmatpush1.bf16.msra.mxu0 %v2373
      %2445 = vmatprep.subr.bf16.mxu0 0
      %2446 = vmatpush1.bf16.msra.mxu0 %v2374
      %2447 = vmatprep.subr.bf16.mxu0 0
      %2448 = vmatpush1.bf16.msra.mxu0 %v2375
      %2449 = vmatprep.subr.bf16.mxu0 0
      %2450 = vmatpush1.bf16.msra.mxu0 %v2376
      %2451 = vmatprep.subr.bf16.mxu0 0
      %2452 = vmatpush1.bf16.msra.mxu0 %v2377
      %2453 = vmatprep.subr.bf16.mxu0 0
      %2454 = vmatpush1.bf16.msra.mxu0 %v2378
      %2455 = vmatprep.subr.bf16.mxu0 0
      %2456 = vmatpush1.bf16.msra.mxu0 %v2379
      %2457 = vmatprep.subr.bf16.mxu0 0
      %2458 = vmatpush1.bf16.msra.mxu0 %v2380
      %2459 = vmatprep.subr.bf16.mxu0 0
      %2460 = vmatpush1.bf16.msra.mxu0 %v2381
      %2461 = vmatprep.subr.bf16.mxu0 0
      %2462 = vmatpush1.bf16.msra.mxu0 %v2382
      %2463 = vmatprep.mubr.bf16.mxu0 %v2170
      %2464 = vmatmul.mubr.bf16.gmra.mrb[0].mxu0 %v2169
      %v2465 = vpop.f32.mrb[0].mxu0
      %v2466 = vadd.f32 0.0, %v2465
      %v2467 = vpop.f32.mrb[0].mxu0
      %v2468 = vpop.f32.mrb[0].mxu0
      %v2469 = vadd.f32 0.0, %v2468
      %v2470 = vpop.f32.mrb[0].mxu0
      %2471 = vdwg.mxu0
      %2472 = vmatprep.subr.bf16.mxu0 0
      %2473 = vmatpush1.bf16.msra.mxu0 %v2383
      %2474 = vmatprep.subr.bf16.mxu0 0
      %2475 = vmatpush1.bf16.msra.mxu0 %v2384
      %2476 = vmatprep.subr.bf16.mxu0 0
      %2477 = vmatpush1.bf16.msra.mxu0 %v2385
      %2478 = vmatprep.subr.bf16.mxu0 0
      %2479 = vmatpush1.bf16.msra.mxu0 %v2386
      %2480 = vmatprep.subr.bf16.mxu0 0
      %2481 = vmatpush1.bf16.msra.mxu0 %v2387
      %2482 = vmatprep.subr.bf16.mxu0 0
      %2483 = vmatpush1.bf16.msra.mxu0 %v2388
      %2484 = vmatprep.subr.bf16.mxu0 0
      %2485 = vmatpush1.bf16.msra.mxu0 %v2389
      %2486 = vmatprep.subr.bf16.mxu0 0
      %2487 = vmatpush1.bf16.msra.mxu0 %v2390
      %2488 = vmatprep.subr.bf16.mxu0 0
      %2489 = vmatpush1.bf16.msra.mxu0 %v2391
      %2490 = vmatprep.subr.bf16.mxu0 0
      %2491 = vmatpush1.bf16.msra.mxu0 %v2392
      %2492 = vmatprep.subr.bf16.mxu0 0
      %2493 = vmatpush1.bf16.msra.mxu0 %v2393
      %2494 = vmatprep.subr.bf16.mxu0 0
      %2495 = vmatpush1.bf16.msra.mxu0 %v2394
      %2496 = vmatprep.subr.bf16.mxu0 0
      %2497 = vmatpush1.bf16.msra.mxu0 %v2395
      %2498 = vmatprep.subr.bf16.mxu0 0
      %2499 = vmatpush1.bf16.msra.mxu0 %v2396
      %2500 = vmatprep.subr.bf16.mxu0 0
      %2501 = vmatpush1.bf16.msra.mxu0 %v2397
      %2502 = vmatprep.subr.bf16.mxu0 0
      %2503 = vmatpush1.bf16.msra.mxu0 %v2398
      %2504 = vmatprep.mubr.bf16.mxu0 %v2172
      %2505 = vmatmul.mubr.bf16.gmra.mrb[0].mxu0 %v2171
      %v2506 = vpop.f32.mrb[0].mxu0
      %v2507 = vadd.f32 %v2466, %v2506
      %v2508 = vpop.f32.mrb[0].mxu0
      %v2509 = vpop.f32.mrb[0].mxu0
      %v2510 = vadd.f32 %v2469, %v2509
      %v2511 = vpop.f32.mrb[0].mxu0
      %2512 = vdwg.mxu0
      %v2513 = vadd.f32 %v1611, %v2507
      %v2514 = vadd.f32 %v1612, %v2510
      %s2515 = scalar_lea.vmem %s16, %s33
      %v2516 = vld [vmem:[%s2515] sm:$0x1]
      %v2518 = vlaneseq
      %v2519 = vshrl.u32 %v2518, 7
      %v2520 = vsub.s32 0, %v2519
      %v2521 = vrot.slane %v2516, %v2520
      %v2523 = vadd.f32 %v2513, %v2521
      %v2524 = vadd.f32 %v2514, %v2521
      %2525 = vst [vmem:[%s565] sm:$0xff] %v2523
      %2526 = vst [vmem:[%s565 + $0x8] sm:$0xff] %v2524
      %s2527 = smul.u32 2, %s32
      %p2528 = scmp.lt.s32.totalorder %s2527, 3
      %s2529 = scalar_select %p2528, %s2527, 3
      %s2530 = smul.addr %s2529, 8
      %s2531 = scalar_lea.vmem %s17, %s2530
      // Predicated region
      $region93: #{swin_transformer_forward.1} parent=87 // pred_check
        %p2532 = pneg %p420
      $region94: #{swin_transformer_forward.1} parent=87 // pred_check_branch
        %2534 = sbr.rel (%p2532) target = $region96
      $region95: #{swin_transformer_forward.1} parent=87 // pred_region
        %s2535 = smul.u32 2, %s32
      $region96: #{swin_transformer_forward.1} parent=87 // pred_fallthru
        _
    $region88: #{swin_transformer_forward.1} parent=5 // pred_fallthru
      _
    %p2536 = scmp.le.s32.totalorder 2, %s23
    // Predicated region
    $region97: #{swin_transformer_forward.1} parent=5 // pred_check
      %p2537 = pneg %p2536
    $region98: #{swin_transformer_forward.1} parent=5 // pred_check_branch
      %2539 = sbr.rel (%p2537) target = $region100
    $region99: #{swin_transformer_forward.1} parent=5 // pred_region
      %s2540 = ssub.s32 %s23, 2
      // Predicated region
      $region101: #{swin_transformer_forward.1} parent=99 // pred_check
        %p2541 = pneg %p426
      $region102: #{swin_transformer_forward.1} parent=99 // pred_check_branch
        %2543 = sbr.rel (%p2541) target = $region104
      $region103: #{swin_transformer_forward.1} parent=99 // pred_region
        %s2544 = smul.u32 2, %s34
        %p2545 = scmp.lt.s32.totalorder %s2544, 3
        %s2546 = scalar_select %p2545, %s2544, 3
        %s2547 = smul.addr %s2546, 8
        %s2548 = scalar_lea.vmem %s17, %s2547
      $region104: #{swin_transformer_forward.1} parent=99 // pred_fallthru
        _
    $region100: #{swin_transformer_forward.1} parent=5 // pred_fallthru
      _
  $region6: #{swin_transformer_forward.1} parent=0 // loop_footer
    %s27 = sadd.s32 1, %s23
  $region7: #{swin_transformer_forward.1} parent=0 // loop_footer_branch
    %22 = sbr.rel target = $region3
  $region8: #{swin_transformer_forward.1} parent=0 // loop_exit
    _

</llo_original>
